<compile_context>
chip_gen: v6e
topology: v6e:2x2x1
jax: 0.10.0
libtpu: 0.0.40
codegen_flags: <defaults>
</compile_context>

<pallas_src>
import functools

import jax
import jax.numpy as jnp
from jax import lax
from jax.experimental import pallas as pl
from jax.experimental.pallas import tpu as pltpu


def _lstm_fc_kernel(x_ref, wih_ref, whh_ref, b_ref, wfc_ref, bfc_ref, out_ref,
                    *, batch, seq_len):
    """Full LSTM recurrence + final Linear for one whole (small) batch.

    x_ref:   (B*T, I)  float32, batch-major flattened rows (row = b*T + t)
    wih_ref: (I, 4H)   float32, gate columns ordered [i, f, o, g]
    whh_ref: (H, 4H)   float32, gate columns ordered [i, f, o, g]
    b_ref:   (1, 4H)   float32, combined b_ih + b_hh, same gate order
    wfc_ref: (H, O)    float32
    bfc_ref: (1, O)    float32
    out_ref: (B, O)    float32
    """
    B, T = batch, seq_len
    H = whh_ref.shape[0]
    H3 = 3 * H

    # Loop-invariant loads hoisted once (no per-step VMEM re-reads).
    whh = whh_ref[...]

    # Hoisted input projection: one MXU call for all B*T rows, combined bias
    # folded in once outside the loop (no per-step broadcast re-materialization).
    xg = (
        jnp.dot(x_ref[...], wih_ref[...], preferred_element_type=jnp.float32)
        + b_ref[...]
    )                               # (B*T, 4H)
    xg = xg.reshape(B, T, 4 * H)    # split of the sublane dim; slices below are static

    # Pre-slice per-step gate inputs (static slices, off the h-critical path).
    xg_steps = [xg[:, t, :] for t in range(T)]

    h = jnp.zeros((B, H), jnp.float32)
    c = jnp.zeros((B, H), jnp.float32)

    # Fully unrolled recurrence: T is a static Python int, so the scheduler
    # sees across time steps and can overlap MXU/EUP/VPU work.
    for t in range(T):
        gates = xg_steps[t] + jnp.dot(h, whh, preferred_element_type=jnp.float32)
        # Gate order [i, f, o, g]: one sigmoid over 3H contiguous lanes,
        # one tanh over the last H lanes.
        sig = jax.nn.sigmoid(gates[:, :H3])
        g_g = jnp.tanh(gates[:, H3:])
        i_g = sig[:, 0 * H:1 * H]
        f_g = sig[:, 1 * H:2 * H]
        o_g = sig[:, 2 * H:3 * H]
        c = f_g * c + i_g * g_g
        h = o_g * jnp.tanh(c)

    # Dropout: nn.Dropout in eval mode is identity (and the LSTM's internal
    # dropout is a no-op for num_layers == 1), so no masking is applied here.
    # TODO(synk): training-mode dropout (p=0.5, RNG mask) is not implemented.
    out_ref[...] = (
        jnp.dot(h, wfc_ref[...], preferred_element_type=jnp.float32)
        + bfc_ref[...]
    )


def trajectory_prediction_forward(x, kernel_params):
    """x: (B, T, I) float32 (batch_first, like the PyTorch module). Returns (B, O)."""
    wih, whh, b_comb, wfc, bfc = kernel_params
    B, T, _ = x.shape
    O = wfc.shape[1]

    # Free metadata reshape on the HBM array; no separate transpose pass.
    x_flat = x.reshape(B * T, x.shape[2])

    kernel = pl.pallas_call(
        functools.partial(_lstm_fc_kernel, batch=B, seq_len=T),
        out_shape=jax.ShapeDtypeStruct((B, O), jnp.float32),
        in_specs=[pl.BlockSpec(memory_space=pltpu.MemorySpace.VMEM)] * 6,
        out_specs=pl.BlockSpec(memory_space=pltpu.MemorySpace.VMEM),
    )
    return kernel(x_flat, wih, whh, b_comb, wfc, bfc)


def init_torch_params(key, input_size, hidden_size, output_size):
    """PyTorch-layout params, PyTorch default init U(-1/sqrt(H), 1/sqrt(H)).

    Gate row order is PyTorch's [i, f, g, o].
    """
    k = 1.0 / jnp.sqrt(jnp.float32(hidden_size))
    keys = jax.random.split(key, 6)
    w_ih = jax.random.uniform(keys[0], (4 * hidden_size, input_size), jnp.float32, -k, k)
    w_hh = jax.random.uniform(keys[1], (4 * hidden_size, hidden_size), jnp.float32, -k, k)
    b_ih = jax.random.uniform(keys[2], (4 * hidden_size,), jnp.float32, -k, k)
    b_hh = jax.random.uniform(keys[3], (4 * hidden_size,), jnp.float32, -k, k)
    w_fc = jax.random.uniform(keys[4], (output_size, hidden_size), jnp.float32, -k, k)
    b_fc = jax.random.uniform(keys[5], (output_size,), jnp.float32, -k, k)
    return (w_ih, w_hh, b_ih, b_hh, w_fc, b_fc)


def pack_params_for_kernel(torch_params, hidden_size):
    """PyTorch layout -> kernel layout.

    - transpose to right-multiply form,
    - combine the two biases,
    - permute gate blocks [i, f, g, o] -> [i, f, o, g] so the three sigmoid
      gates occupy contiguous lanes.
    """
    w_ih, w_hh, b_ih, b_hh, w_fc, b_fc = torch_params
    H = hidden_size
    perm = jnp.concatenate([
        jnp.arange(0, 2 * H),        # i, f
        jnp.arange(3 * H, 4 * H),    # o
        jnp.arange(2 * H, 3 * H),    # g
    ])
    return (
        w_ih[perm].T,                          # (I, 4H)
        w_hh[perm].T,                          # (H, 4H)
        (b_ih + b_hh)[perm].reshape(1, -1),    # (1, 4H)
        w_fc.T,                                # (H, O)
        b_fc.reshape(1, -1),                   # (1, O)
    )


def _reference_forward(x, torch_params):
    """Pure-JAX reference in PyTorch conventions (gate order [i, f, g, o])."""
    w_ih, w_hh, b_ih, b_hh, w_fc, b_fc = torch_params
    H = w_hh.shape[1]
    B = x.shape[0]

    def step(carry, x_t):
        h, c = carry
        gates = x_t @ w_ih.T + h @ w_hh.T + b_ih + b_hh
        i_g = jax.nn.sigmoid(gates[:, 0 * H:1 * H])
        f_g = jax.nn.sigmoid(gates[:, 1 * H:2 * H])
        g_g = jnp.tanh(gates[:, 2 * H:3 * H])
        o_g = jax.nn.sigmoid(gates[:, 3 * H:4 * H])
        c_new = f_g * c + i_g * g_g
        h_new = o_g * jnp.tanh(c_new)
        return (h_new, c_new), None

    h0 = jnp.zeros((B, H), jnp.float32)
    c0 = jnp.zeros((B, H), jnp.float32)
    (h_last, _), _ = lax.scan(step, (h0, c0), jnp.transpose(x, (1, 0, 2)))
    return h_last @ w_fc.T + b_fc


if __name__ == "__main__":
    # Small shapes consistent with the module's forward:
    # x: (batch=8, seq=8, input_size=4), hidden_size=32 (4H = 128 lanes), output=2.
    B, T, I, H, O = 8, 8, 4, 32, 2

    key = jax.random.PRNGKey(0)
    k_x, k_p = jax.random.split(key)
    x = jax.random.normal(k_x, (B, T, I), jnp.float32)

    torch_params = init_torch_params(k_p, I, H, O)
    kernel_params = pack_params_for_kernel(torch_params, H)

    out = trajectory_prediction_forward(x, kernel_params)
    out = jax.block_until_ready(out)

    ref = _reference_forward(x, torch_params)
    assert out.shape == (B, O)
    assert jnp.allclose(out, ref, atol=1e-5, rtol=1e-5), "mismatch vs JAX reference"

    print("KERNEL_OK")
</pallas_src>

<mosaic_0001>
module attributes {stable_mosaic.version = 11 : i64} {
  func.func @_lstm_fc_kernel(%arg0: memref<64x4xf32, #tpu.memory_space<vmem>>, %arg1: memref<4x128xf32, #tpu.memory_space<vmem>>, %arg2: memref<32x128xf32, #tpu.memory_space<vmem>>, %arg3: memref<1x128xf32, #tpu.memory_space<vmem>>, %arg4: memref<32x2xf32, #tpu.memory_space<vmem>>, %arg5: memref<1x2xf32, #tpu.memory_space<vmem>>, %arg6: memref<8x2xf32, #tpu.memory_space<vmem>>) attributes {dimension_semantics = [], scalar_prefetch = 0 : i64, scratch_operands = 0 : i64, tpu.core_type = #tpu.core_type<tc>} {
    %c0 = arith.constant 0 : index
    %c0_0 = arith.constant 0 : index
    %0 = vector.load %arg2[%c0, %c0_0] : memref<32x128xf32, #tpu.memory_space<vmem>>, vector<32x128xf32>
    %c0_1 = arith.constant 0 : index
    %c0_2 = arith.constant 0 : index
    %1 = vector.load %arg0[%c0_1, %c0_2] : memref<64x4xf32, #tpu.memory_space<vmem>>, vector<64x4xf32>
    %c0_3 = arith.constant 0 : index
    %c0_4 = arith.constant 0 : index
    %2 = vector.load %arg1[%c0_3, %c0_4] : memref<4x128xf32, #tpu.memory_space<vmem>>, vector<4x128xf32>
    %cst = arith.constant dense<0.000000e+00> : vector<64x128xf32>
    %3 = tpu.matmul %1, %2, %cst {dimension_numbers = #tpu.dot_dimension_numbers<[1], [0], [0], [1], [0, 0, 1, 1], [], []>} : vector<64x4xf32>, vector<4x128xf32>, vector<64x128xf32> -> vector<64x128xf32>
    %c0_5 = arith.constant 0 : index
    %c0_6 = arith.constant 0 : index
    %4 = vector.load %arg3[%c0_5, %c0_6] : memref<1x128xf32, #tpu.memory_space<vmem>>, vector<1x128xf32>
    %5 = vector.broadcast %4 : vector<1x128xf32> to vector<64x128xf32>
    %6 = arith.addf %3, %5 : vector<64x128xf32>
    %7 = vector.shape_cast %6 : vector<64x128xf32> to vector<8x8x128xf32>
    %8 = vector.extract_strided_slice %7 {offsets = [0, 0, 0], sizes = [8, 1, 128], strides = [1, 1, 1]} : vector<8x8x128xf32> to vector<8x1x128xf32>
    %9 = vector.shape_cast %8 : vector<8x1x128xf32> to vector<8x128xf32>
    %10 = vector.extract_strided_slice %7 {offsets = [0, 1, 0], sizes = [8, 1, 128], strides = [1, 1, 1]} : vector<8x8x128xf32> to vector<8x1x128xf32>
    %11 = vector.shape_cast %10 : vector<8x1x128xf32> to vector<8x128xf32>
    %12 = vector.extract_strided_slice %7 {offsets = [0, 2, 0], sizes = [8, 1, 128], strides = [1, 1, 1]} : vector<8x8x128xf32> to vector<8x1x128xf32>
    %13 = vector.shape_cast %12 : vector<8x1x128xf32> to vector<8x128xf32>
    %14 = vector.extract_strided_slice %7 {offsets = [0, 3, 0], sizes = [8, 1, 128], strides = [1, 1, 1]} : vector<8x8x128xf32> to vector<8x1x128xf32>
    %15 = vector.shape_cast %14 : vector<8x1x128xf32> to vector<8x128xf32>
    %16 = vector.extract_strided_slice %7 {offsets = [0, 4, 0], sizes = [8, 1, 128], strides = [1, 1, 1]} : vector<8x8x128xf32> to vector<8x1x128xf32>
    %17 = vector.shape_cast %16 : vector<8x1x128xf32> to vector<8x128xf32>
    %18 = vector.extract_strided_slice %7 {offsets = [0, 5, 0], sizes = [8, 1, 128], strides = [1, 1, 1]} : vector<8x8x128xf32> to vector<8x1x128xf32>
    %19 = vector.shape_cast %18 : vector<8x1x128xf32> to vector<8x128xf32>
    %20 = vector.extract_strided_slice %7 {offsets = [0, 6, 0], sizes = [8, 1, 128], strides = [1, 1, 1]} : vector<8x8x128xf32> to vector<8x1x128xf32>
    %21 = vector.shape_cast %20 : vector<8x1x128xf32> to vector<8x128xf32>
    %22 = vector.extract_strided_slice %7 {offsets = [0, 7, 0], sizes = [8, 1, 128], strides = [1, 1, 1]} : vector<8x8x128xf32> to vector<8x1x128xf32>
    %23 = vector.shape_cast %22 : vector<8x1x128xf32> to vector<8x128xf32>
    %cst_7 = arith.constant 0.000000e+00 : f32
    %24 = vector.broadcast %cst_7 : f32 to vector<8x32xf32>
    %cst_8 = arith.constant 0.000000e+00 : f32
    %25 = vector.broadcast %cst_8 : f32 to vector<8x32xf32>
    %cst_9 = arith.constant dense<0.000000e+00> : vector<8x128xf32>
    %26 = tpu.matmul %24, %0, %cst_9 {dimension_numbers = #tpu.dot_dimension_numbers<[1], [0], [0], [1], [0, 0, 1, 1], [], []>} : vector<8x32xf32>, vector<32x128xf32>, vector<8x128xf32> -> vector<8x128xf32>
    %27 = arith.addf %9, %26 : vector<8x128xf32>
    %28 = vector.extract_strided_slice %27 {offsets = [0, 0], sizes = [8, 96], strides = [1, 1]} : vector<8x128xf32> to vector<8x96xf32>
    %29 = arith.negf %28 : vector<8x96xf32>
    %30 = math.exp %29 : vector<8x96xf32>
    %cst_10 = arith.constant 1.000000e+00 : f32
    %31 = vector.broadcast %cst_10 : f32 to vector<8x96xf32>
    %32 = arith.addf %31, %30 : vector<8x96xf32>
    %33 = arith.divf %31, %32 : vector<8x96xf32>
    %34 = vector.extract_strided_slice %27 {offsets = [0, 96], sizes = [8, 32], strides = [1, 1]} : vector<8x128xf32> to vector<8x32xf32>
    %35 = math.tanh %34 : vector<8x32xf32>
    %36 = vector.extract_strided_slice %33 {offsets = [0, 0], sizes = [8, 32], strides = [1, 1]} : vector<8x96xf32> to vector<8x32xf32>
    %37 = vector.extract_strided_slice %33 {offsets = [0, 32], sizes = [8, 32], strides = [1, 1]} : vector<8x96xf32> to vector<8x32xf32>
    %38 = vector.extract_strided_slice %33 {offsets = [0, 64], sizes = [8, 32], strides = [1, 1]} : vector<8x96xf32> to vector<8x32xf32>
    %39 = arith.mulf %37, %25 : vector<8x32xf32>
    %40 = arith.mulf %36, %35 : vector<8x32xf32>
    %41 = arith.addf %39, %40 : vector<8x32xf32>
    %42 = math.tanh %41 : vector<8x32xf32>
    %43 = arith.mulf %38, %42 : vector<8x32xf32>
    %cst_11 = arith.constant dense<0.000000e+00> : vector<8x128xf32>
    %44 = tpu.matmul %43, %0, %cst_11 {dimension_numbers = #tpu.dot_dimension_numbers<[1], [0], [0], [1], [0, 0, 1, 1], [], []>} : vector<8x32xf32>, vector<32x128xf32>, vector<8x128xf32> -> vector<8x128xf32>
    %45 = arith.addf %11, %44 : vector<8x128xf32>
    %46 = vector.extract_strided_slice %45 {offsets = [0, 0], sizes = [8, 96], strides = [1, 1]} : vector<8x128xf32> to vector<8x96xf32>
    %47 = arith.negf %46 : vector<8x96xf32>
    %48 = math.exp %47 : vector<8x96xf32>
    %cst_12 = arith.constant 1.000000e+00 : f32
    %49 = vector.broadcast %cst_12 : f32 to vector<8x96xf32>
    %50 = arith.addf %49, %48 : vector<8x96xf32>
    %51 = arith.divf %49, %50 : vector<8x96xf32>
    %52 = vector.extract_strided_slice %45 {offsets = [0, 96], sizes = [8, 32], strides = [1, 1]} : vector<8x128xf32> to vector<8x32xf32>
    %53 = math.tanh %52 : vector<8x32xf32>
    %54 = vector.extract_strided_slice %51 {offsets = [0, 0], sizes = [8, 32], strides = [1, 1]} : vector<8x96xf32> to vector<8x32xf32>
    %55 = vector.extract_strided_slice %51 {offsets = [0, 32], sizes = [8, 32], strides = [1, 1]} : vector<8x96xf32> to vector<8x32xf32>
    %56 = vector.extract_strided_slice %51 {offsets = [0, 64], sizes = [8, 32], strides = [1, 1]} : vector<8x96xf32> to vector<8x32xf32>
    %57 = arith.mulf %55, %41 : vector<8x32xf32>
    %58 = arith.mulf %54, %53 : vector<8x32xf32>
    %59 = arith.addf %57, %58 : vector<8x32xf32>
    %60 = math.tanh %59 : vector<8x32xf32>
    %61 = arith.mulf %56, %60 : vector<8x32xf32>
    %cst_13 = arith.constant dense<0.000000e+00> : vector<8x128xf32>
    %62 = tpu.matmul %61, %0, %cst_13 {dimension_numbers = #tpu.dot_dimension_numbers<[1], [0], [0], [1], [0, 0, 1, 1], [], []>} : vector<8x32xf32>, vector<32x128xf32>, vector<8x128xf32> -> vector<8x128xf32>
    %63 = arith.addf %13, %62 : vector<8x128xf32>
    %64 = vector.extract_strided_slice %63 {offsets = [0, 0], sizes = [8, 96], strides = [1, 1]} : vector<8x128xf32> to vector<8x96xf32>
    %65 = arith.negf %64 : vector<8x96xf32>
    %66 = math.exp %65 : vector<8x96xf32>
    %cst_14 = arith.constant 1.000000e+00 : f32
    %67 = vector.broadcast %cst_14 : f32 to vector<8x96xf32>
    %68 = arith.addf %67, %66 : vector<8x96xf32>
    %69 = arith.divf %67, %68 : vector<8x96xf32>
    %70 = vector.extract_strided_slice %63 {offsets = [0, 96], sizes = [8, 32], strides = [1, 1]} : vector<8x128xf32> to vector<8x32xf32>
    %71 = math.tanh %70 : vector<8x32xf32>
    %72 = vector.extract_strided_slice %69 {offsets = [0, 0], sizes = [8, 32], strides = [1, 1]} : vector<8x96xf32> to vector<8x32xf32>
    %73 = vector.extract_strided_slice %69 {offsets = [0, 32], sizes = [8, 32], strides = [1, 1]} : vector<8x96xf32> to vector<8x32xf32>
    %74 = vector.extract_strided_slice %69 {offsets = [0, 64], sizes = [8, 32], strides = [1, 1]} : vector<8x96xf32> to vector<8x32xf32>
    %75 = arith.mulf %73, %59 : vector<8x32xf32>
    %76 = arith.mulf %72, %71 : vector<8x32xf32>
    %77 = arith.addf %75, %76 : vector<8x32xf32>
    %78 = math.tanh %77 : vector<8x32xf32>
    %79 = arith.mulf %74, %78 : vector<8x32xf32>
    %cst_15 = arith.constant dense<0.000000e+00> : vector<8x128xf32>
    %80 = tpu.matmul %79, %0, %cst_15 {dimension_numbers = #tpu.dot_dimension_numbers<[1], [0], [0], [1], [0, 0, 1, 1], [], []>} : vector<8x32xf32>, vector<32x128xf32>, vector<8x128xf32> -> vector<8x128xf32>
    %81 = arith.addf %15, %80 : vector<8x128xf32>
    %82 = vector.extract_strided_slice %81 {offsets = [0, 0], sizes = [8, 96], strides = [1, 1]} : vector<8x128xf32> to vector<8x96xf32>
    %83 = arith.negf %82 : vector<8x96xf32>
    %84 = math.exp %83 : vector<8x96xf32>
    %cst_16 = arith.constant 1.000000e+00 : f32
    %85 = vector.broadcast %cst_16 : f32 to vector<8x96xf32>
    %86 = arith.addf %85, %84 : vector<8x96xf32>
    %87 = arith.divf %85, %86 : vector<8x96xf32>
    %88 = vector.extract_strided_slice %81 {offsets = [0, 96], sizes = [8, 32], strides = [1, 1]} : vector<8x128xf32> to vector<8x32xf32>
    %89 = math.tanh %88 : vector<8x32xf32>
    %90 = vector.extract_strided_slice %87 {offsets = [0, 0], sizes = [8, 32], strides = [1, 1]} : vector<8x96xf32> to vector<8x32xf32>
    %91 = vector.extract_strided_slice %87 {offsets = [0, 32], sizes = [8, 32], strides = [1, 1]} : vector<8x96xf32> to vector<8x32xf32>
    %92 = vector.extract_strided_slice %87 {offsets = [0, 64], sizes = [8, 32], strides = [1, 1]} : vector<8x96xf32> to vector<8x32xf32>
    %93 = arith.mulf %91, %77 : vector<8x32xf32>
    %94 = arith.mulf %90, %89 : vector<8x32xf32>
    %95 = arith.addf %93, %94 : vector<8x32xf32>
    %96 = math.tanh %95 : vector<8x32xf32>
    %97 = arith.mulf %92, %96 : vector<8x32xf32>
    %cst_17 = arith.constant dense<0.000000e+00> : vector<8x128xf32>
    %98 = tpu.matmul %97, %0, %cst_17 {dimension_numbers = #tpu.dot_dimension_numbers<[1], [0], [0], [1], [0, 0, 1, 1], [], []>} : vector<8x32xf32>, vector<32x128xf32>, vector<8x128xf32> -> vector<8x128xf32>
    %99 = arith.addf %17, %98 : vector<8x128xf32>
    %100 = vector.extract_strided_slice %99 {offsets = [0, 0], sizes = [8, 96], strides = [1, 1]} : vector<8x128xf32> to vector<8x96xf32>
    %101 = arith.negf %100 : vector<8x96xf32>
    %102 = math.exp %101 : vector<8x96xf32>
    %cst_18 = arith.constant 1.000000e+00 : f32
    %103 = vector.broadcast %cst_18 : f32 to vector<8x96xf32>
    %104 = arith.addf %103, %102 : vector<8x96xf32>
    %105 = arith.divf %103, %104 : vector<8x96xf32>
    %106 = vector.extract_strided_slice %99 {offsets = [0, 96], sizes = [8, 32], strides = [1, 1]} : vector<8x128xf32> to vector<8x32xf32>
    %107 = math.tanh %106 : vector<8x32xf32>
    %108 = vector.extract_strided_slice %105 {offsets = [0, 0], sizes = [8, 32], strides = [1, 1]} : vector<8x96xf32> to vector<8x32xf32>
    %109 = vector.extract_strided_slice %105 {offsets = [0, 32], sizes = [8, 32], strides = [1, 1]} : vector<8x96xf32> to vector<8x32xf32>
    %110 = vector.extract_strided_slice %105 {offsets = [0, 64], sizes = [8, 32], strides = [1, 1]} : vector<8x96xf32> to vector<8x32xf32>
    %111 = arith.mulf %109, %95 : vector<8x32xf32>
    %112 = arith.mulf %108, %107 : vector<8x32xf32>
    %113 = arith.addf %111, %112 : vector<8x32xf32>
    %114 = math.tanh %113 : vector<8x32xf32>
    %115 = arith.mulf %110, %114 : vector<8x32xf32>
    %cst_19 = arith.constant dense<0.000000e+00> : vector<8x128xf32>
    %116 = tpu.matmul %115, %0, %cst_19 {dimension_numbers = #tpu.dot_dimension_numbers<[1], [0], [0], [1], [0, 0, 1, 1], [], []>} : vector<8x32xf32>, vector<32x128xf32>, vector<8x128xf32> -> vector<8x128xf32>
    %117 = arith.addf %19, %116 : vector<8x128xf32>
    %118 = vector.extract_strided_slice %117 {offsets = [0, 0], sizes = [8, 96], strides = [1, 1]} : vector<8x128xf32> to vector<8x96xf32>
    %119 = arith.negf %118 : vector<8x96xf32>
    %120 = math.exp %119 : vector<8x96xf32>
    %cst_20 = arith.constant 1.000000e+00 : f32
    %121 = vector.broadcast %cst_20 : f32 to vector<8x96xf32>
    %122 = arith.addf %121, %120 : vector<8x96xf32>
    %123 = arith.divf %121, %122 : vector<8x96xf32>
    %124 = vector.extract_strided_slice %117 {offsets = [0, 96], sizes = [8, 32], strides = [1, 1]} : vector<8x128xf32> to vector<8x32xf32>
    %125 = math.tanh %124 : vector<8x32xf32>
    %126 = vector.extract_strided_slice %123 {offsets = [0, 0], sizes = [8, 32], strides = [1, 1]} : vector<8x96xf32> to vector<8x32xf32>
    %127 = vector.extract_strided_slice %123 {offsets = [0, 32], sizes = [8, 32], strides = [1, 1]} : vector<8x96xf32> to vector<8x32xf32>
    %128 = vector.extract_strided_slice %123 {offsets = [0, 64], sizes = [8, 32], strides = [1, 1]} : vector<8x96xf32> to vector<8x32xf32>
    %129 = arith.mulf %127, %113 : vector<8x32xf32>
    %130 = arith.mulf %126, %125 : vector<8x32xf32>
    %131 = arith.addf %129, %130 : vector<8x32xf32>
    %132 = math.tanh %131 : vector<8x32xf32>
    %133 = arith.mulf %128, %132 : vector<8x32xf32>
    %cst_21 = arith.constant dense<0.000000e+00> : vector<8x128xf32>
    %134 = tpu.matmul %133, %0, %cst_21 {dimension_numbers = #tpu.dot_dimension_numbers<[1], [0], [0], [1], [0, 0, 1, 1], [], []>} : vector<8x32xf32>, vector<32x128xf32>, vector<8x128xf32> -> vector<8x128xf32>
    %135 = arith.addf %21, %134 : vector<8x128xf32>
    %136 = vector.extract_strided_slice %135 {offsets = [0, 0], sizes = [8, 96], strides = [1, 1]} : vector<8x128xf32> to vector<8x96xf32>
    %137 = arith.negf %136 : vector<8x96xf32>
    %138 = math.exp %137 : vector<8x96xf32>
    %cst_22 = arith.constant 1.000000e+00 : f32
    %139 = vector.broadcast %cst_22 : f32 to vector<8x96xf32>
    %140 = arith.addf %139, %138 : vector<8x96xf32>
    %141 = arith.divf %139, %140 : vector<8x96xf32>
    %142 = vector.extract_strided_slice %135 {offsets = [0, 96], sizes = [8, 32], strides = [1, 1]} : vector<8x128xf32> to vector<8x32xf32>
    %143 = math.tanh %142 : vector<8x32xf32>
    %144 = vector.extract_strided_slice %141 {offsets = [0, 0], sizes = [8, 32], strides = [1, 1]} : vector<8x96xf32> to vector<8x32xf32>
    %145 = vector.extract_strided_slice %141 {offsets = [0, 32], sizes = [8, 32], strides = [1, 1]} : vector<8x96xf32> to vector<8x32xf32>
    %146 = vector.extract_strided_slice %141 {offsets = [0, 64], sizes = [8, 32], strides = [1, 1]} : vector<8x96xf32> to vector<8x32xf32>
    %147 = arith.mulf %145, %131 : vector<8x32xf32>
    %148 = arith.mulf %144, %143 : vector<8x32xf32>
    %149 = arith.addf %147, %148 : vector<8x32xf32>
    %150 = math.tanh %149 : vector<8x32xf32>
    %151 = arith.mulf %146, %150 : vector<8x32xf32>
    %cst_23 = arith.constant dense<0.000000e+00> : vector<8x128xf32>
    %152 = tpu.matmul %151, %0, %cst_23 {dimension_numbers = #tpu.dot_dimension_numbers<[1], [0], [0], [1], [0, 0, 1, 1], [], []>} : vector<8x32xf32>, vector<32x128xf32>, vector<8x128xf32> -> vector<8x128xf32>
    %153 = arith.addf %23, %152 : vector<8x128xf32>
    %154 = vector.extract_strided_slice %153 {offsets = [0, 0], sizes = [8, 96], strides = [1, 1]} : vector<8x128xf32> to vector<8x96xf32>
    %155 = arith.negf %154 : vector<8x96xf32>
    %156 = math.exp %155 : vector<8x96xf32>
    %cst_24 = arith.constant 1.000000e+00 : f32
    %157 = vector.broadcast %cst_24 : f32 to vector<8x96xf32>
    %158 = arith.addf %157, %156 : vector<8x96xf32>
    %159 = arith.divf %157, %158 : vector<8x96xf32>
    %160 = vector.extract_strided_slice %153 {offsets = [0, 96], sizes = [8, 32], strides = [1, 1]} : vector<8x128xf32> to vector<8x32xf32>
    %161 = math.tanh %160 : vector<8x32xf32>
    %162 = vector.extract_strided_slice %159 {offsets = [0, 0], sizes = [8, 32], strides = [1, 1]} : vector<8x96xf32> to vector<8x32xf32>
    %163 = vector.extract_strided_slice %159 {offsets = [0, 32], sizes = [8, 32], strides = [1, 1]} : vector<8x96xf32> to vector<8x32xf32>
    %164 = vector.extract_strided_slice %159 {offsets = [0, 64], sizes = [8, 32], strides = [1, 1]} : vector<8x96xf32> to vector<8x32xf32>
    %165 = arith.mulf %163, %149 : vector<8x32xf32>
    %166 = arith.mulf %162, %161 : vector<8x32xf32>
    %167 = arith.addf %165, %166 : vector<8x32xf32>
    %168 = math.tanh %167 : vector<8x32xf32>
    %169 = arith.mulf %164, %168 : vector<8x32xf32>
    %c0_25 = arith.constant 0 : index
    %c0_26 = arith.constant 0 : index
    %170 = vector.load %arg4[%c0_25, %c0_26] : memref<32x2xf32, #tpu.memory_space<vmem>>, vector<32x2xf32>
    %cst_27 = arith.constant dense<0.000000e+00> : vector<8x2xf32>
    %171 = tpu.matmul %169, %170, %cst_27 {dimension_numbers = #tpu.dot_dimension_numbers<[1], [0], [0], [1], [0, 0, 1, 1], [], []>} : vector<8x32xf32>, vector<32x2xf32>, vector<8x2xf32> -> vector<8x2xf32>
    %c0_28 = arith.constant 0 : index
    %c0_29 = arith.constant 0 : index
    %172 = vector.load %arg5[%c0_28, %c0_29] : memref<1x2xf32, #tpu.memory_space<vmem>>, vector<1x2xf32>
    %173 = vector.broadcast %172 : vector<1x2xf32> to vector<8x2xf32>
    %174 = arith.addf %171, %173 : vector<8x2xf32>
    %c0_30 = arith.constant 0 : index
    %c0_31 = arith.constant 0 : index
    %175 = vector.load %arg6[%c0_30, %c0_31] : memref<8x2xf32, #tpu.memory_space<vmem>>, vector<8x2xf32>
    tpu.vector_store %arg6[%c0_30, %c0_31], %174 {strides = array<i32>} : memref<8x2xf32, #tpu.memory_space<vmem>>, vector<8x2xf32>,
    return
  }
}

</mosaic_0001>

<llo_original>
// kernel: tpu_custom_call.1
$region0: #{tpu_custom_call.1}
  #allocation0 [shape = 'u32[]', space=smem, size = 0x4, offset = 0x4, fixed_abs, tag = 'smem constant byte address 0x4 - core index']
  #allocation1 [shape = 'u32[144,128]{1,0:T(1,128)}', space=vmem, size = 0x12000, scoped, tag = 'internal scratch']
  %s0 = inlined_call_operand.vmem [shape: f32[64,4], index: 0, kind: input, shape index: {}]
  %s1 = inlined_call_operand.vmem [shape: f32[4,128], index: 1, kind: input, shape index: {}]
  %s2 = inlined_call_operand.vmem [shape: f32[32,128], index: 2, kind: input, shape index: {}]
  %s3 = inlined_call_operand.vmem [shape: f32[1,128], index: 3, kind: input, shape index: {}]
  %s4 = inlined_call_operand.vmem [shape: f32[32,2], index: 4, kind: input, shape index: {}]
  %s5 = inlined_call_operand.vmem [shape: f32[1,2], index: 5, kind: input, shape index: {}]
  %s6 = inlined_call_operand.vmem [shape: f32[8,2], index: 6, kind: output, shape index: {}]
  %s7 = sld [smem:[#allocation0]]
  $region34: #{tpu_custom_call.1} parent=0
    _
  %s9 = ssub.s32 1, %s7
  %s10 = scalar_select 0, %s9, %s7
  // Predicated region
  $region2: #{tpu_custom_call.1} parent=0 // pred_check
    _
  $region3: #{tpu_custom_call.1} parent=0 // pred_check_branch
    %12 = sbr.rel (0) target = $region5
  $region4: #{tpu_custom_call.1} parent=0 // pred_region
    _
  $region5: #{tpu_custom_call.1} parent=0 // pred_fallthru
    _
  // Predicated region
  $region6: #{tpu_custom_call.1} parent=0 // pred_check
    _
  $region7: #{tpu_custom_call.1} parent=0 // pred_check_branch
    %14 = sbr.rel (0) target = $region9
  $region8: #{tpu_custom_call.1} parent=0 // pred_region
    _
  $region9: #{tpu_custom_call.1} parent=0 // pred_fallthru
    _
  // Predicated region
  $region10: #{tpu_custom_call.1} parent=0 // pred_check
    _
  $region11: #{tpu_custom_call.1} parent=0 // pred_check_branch
    %16 = sbr.rel (0) target = $region13
  $region12: #{tpu_custom_call.1} parent=0 // pred_region
    _
  $region13: #{tpu_custom_call.1} parent=0 // pred_fallthru
    _
  // Predicated region
  $region14: #{tpu_custom_call.1} parent=0 // pred_check
    _
  $region15: #{tpu_custom_call.1} parent=0 // pred_check_branch
    %18 = sbr.rel (0) target = $region17
  $region16: #{tpu_custom_call.1} parent=0 // pred_region
    _
  $region17: #{tpu_custom_call.1} parent=0 // pred_fallthru
    _
  // Predicated region
  $region18: #{tpu_custom_call.1} parent=0 // pred_check
    _
  $region19: #{tpu_custom_call.1} parent=0 // pred_check_branch
    %20 = sbr.rel (0) target = $region21
  $region20: #{tpu_custom_call.1} parent=0 // pred_region
    _
  $region21: #{tpu_custom_call.1} parent=0 // pred_fallthru
    _
  // Predicated region
  $region22: #{tpu_custom_call.1} parent=0 // pred_check
    _
  $region23: #{tpu_custom_call.1} parent=0 // pred_check_branch
    %22 = sbr.rel (0) target = $region25
  $region24: #{tpu_custom_call.1} parent=0 // pred_region
    _
  $region25: #{tpu_custom_call.1} parent=0 // pred_fallthru
    _
  %v23 = vld [vmem:[%s2] sm:$0xff]
  %v24 = vld [vmem:[%s2 + $0x8] sm:$0xff]
  %v25 = vld [vmem:[%s2 + $0x10] sm:$0xff]
  %v26 = vld [vmem:[%s2 + $0x18] sm:$0xff]
  %v27 = vld [vmem:[%s0] sm:$0xff]
  %v28 = vld [vmem:[%s0 + $0x8] sm:$0xff]
  %v29 = vld [vmem:[%s0 + $0x10] sm:$0xff]
  %v30 = vld [vmem:[%s0 + $0x18] sm:$0xff]
  %v31 = vld [vmem:[%s0 + $0x20] sm:$0xff]
  %v32 = vld [vmem:[%s0 + $0x28] sm:$0xff]
  %v33 = vld [vmem:[%s0 + $0x30] sm:$0xff]
  %v34 = vld [vmem:[%s0 + $0x38] sm:$0xff]
  %v35 = vld [vmem:[%s1] sm:$0xf]
  %v36 = vld [vmem:[%s3] sm:$0x1]
  %v38 = vlaneseq
  %v39 = vshrl.u32 %v38, 7
  %v40 = vsub.s32 0, %v39
  %v41 = vrot.slane %v36, %v40
  %vm43 = vcmask 31744
  %v45 = vsel %vm43, %v27, 0
  %v48 = vsel %vm43, %v28, 0
  %v51 = vsel %vm43, %v29, 0
  %v54 = vsel %vm43, %v30, 0
  %v57 = vsel %vm43, %v31, 0
  %v60 = vsel %vm43, %v32, 0
  %v63 = vsel %vm43, %v33, 0
  %v66 = vsel %vm43, %v34, 0
  %vm68 = vcmask 1043456
  %v70 = vsel %vm68, %v35, 0
  %72 = vmatprep.subr.mxu0 0.0
  %73 = vmatpush1.msra.mxu0 0.0
  %74 = vmatprep.subr.mxu0 0.0
  %75 = vmatpush1.msra.mxu0 0.0
  %76 = vmatprep.subr.mxu0 0.0
  %77 = vmatpush1.msra.mxu0 0.0
  %78 = vmatprep.subr.mxu0 0.0
  %79 = vmatpush1.msra.mxu0 0.0
  %80 = vmatprep.subr.mxu0 0.0
  %81 = vmatpush1.msra.mxu0 0.0
  %82 = vmatprep.subr.mxu0 0.0
  %83 = vmatpush1.msra.mxu0 0.0
  %84 = vmatprep.subr.mxu0 0.0
  %85 = vmatpush1.msra.mxu0 0.0
  %86 = vmatprep.subr.mxu0 0.0
  %87 = vmatpush1.msra.mxu0 0.0
  %88 = vmatprep.subr.mxu0 0.0
  %89 = vmatpush1.msra.mxu0 0.0
  %90 = vmatprep.subr.mxu0 0.0
  %91 = vmatpush1.msra.mxu0 0.0
  %92 = vmatprep.subr.mxu0 0.0
  %93 = vmatpush1.msra.mxu0 0.0
  %94 = vmatprep.subr.mxu0 0.0
  %95 = vmatpush1.msra.mxu0 0.0
  %96 = vmatprep.subr.mxu0 0.0
  %97 = vmatpush1.msra.mxu0 0.0
  %98 = vmatprep.subr.mxu0 0.0
  %99 = vmatpush1.msra.mxu0 0.0
  %100 = vmatprep.subr.mxu0 0.0
  %101 = vmatpush1.msra.mxu0 0.0
  %102 = vmatprep.subr.mxu0 0.0
  %103 = vmatpush1.msra.mxu0 %v70
  %104 = vmatprep.subr.mxu0 0.0
  %105 = vmatpush2.msra.mxu0 0.0
  %106 = vmatprep.subr.mxu0 0.0
  %107 = vmatpush2.msra.mxu0 0.0
  %108 = vmatprep.subr.mxu0 0.0
  %109 = vmatpush2.msra.mxu0 0.0
  %110 = vmatprep.subr.mxu0 0.0
  %111 = vmatpush2.msra.mxu0 0.0
  %112 = vmatprep.subr.mxu0 0.0
  %113 = vmatpush2.msra.mxu0 0.0
  %114 = vmatprep.subr.mxu0 0.0
  %115 = vmatpush2.msra.mxu0 0.0
  %116 = vmatprep.subr.mxu0 0.0
  %117 = vmatpush2.msra.mxu0 0.0
  %118 = vmatprep.subr.mxu0 0.0
  %119 = vmatpush2.msra.mxu0 0.0
  %120 = vmatprep.subr.mxu0 0.0
  %121 = vmatpush2.msra.mxu0 0.0
  %122 = vmatprep.subr.mxu0 0.0
  %123 = vmatpush2.msra.mxu0 0.0
  %124 = vmatprep.subr.mxu0 0.0
  %125 = vmatpush2.msra.mxu0 0.0
  %126 = vmatprep.subr.mxu0 0.0
  %127 = vmatpush2.msra.mxu0 0.0
  %128 = vmatprep.subr.mxu0 0.0
  %129 = vmatpush2.msra.mxu0 0.0
  %130 = vmatprep.subr.mxu0 0.0
  %131 = vmatpush2.msra.mxu0 0.0
  %132 = vmatprep.subr.mxu0 0.0
  %133 = vmatpush2.msra.mxu0 0.0
  %134 = vmatprep.subr.mxu0 0.0
  %135 = vmatpush2.msra.mxu0 0.0
  %136 = vmatprep.mubr.f32.mxu0 0.0
  %137 = vmatmul.mubr.f32.gmra.mxu0 %v45
  %v138 = vpop.f32.mrf.mxu0
  %v139 = vadd.f32 %v41, %v138
  %v140 = vpop.f32.mrf.mxu0
  %141 = vmatprep.mubr.f32.mxu0 0.0
  %142 = vmatmul.mubr.f32.gmra.mxu0 %v48
  %v143 = vpop.f32.mrf.mxu0
  %v144 = vadd.f32 %v41, %v143
  %v145 = vpop.f32.mrf.mxu0
  %146 = vmatprep.mubr.f32.mxu0 0.0
  %147 = vmatmul.mubr.f32.gmra.mxu0 %v51
  %v148 = vpop.f32.mrf.mxu0
  %v149 = vadd.f32 %v41, %v148
  %v150 = vpop.f32.mrf.mxu0
  %151 = vmatprep.mubr.f32.mxu0 0.0
  %152 = vmatmul.mubr.f32.gmra.mxu0 %v54
  %v153 = vpop.f32.mrf.mxu0
  %v154 = vadd.f32 %v41, %v153
  %v155 = vpop.f32.mrf.mxu0
  %156 = vmatprep.mubr.f32.mxu0 0.0
  %157 = vmatmul.mubr.f32.gmra.mxu0 %v57
  %v158 = vpop.f32.mrf.mxu0
  %v159 = vadd.f32 %v41, %v158
  %v160 = vpop.f32.mrf.mxu0
  %161 = vmatprep.mubr.f32.mxu0 0.0
  %162 = vmatmul.mubr.f32.gmra.mxu0 %v60
  %v163 = vpop.f32.mrf.mxu0
  %v164 = vadd.f32 %v41, %v163
  %v165 = vpop.f32.mrf.mxu0
  %166 = vmatprep.mubr.f32.mxu0 0.0
  %167 = vmatmul.mubr.f32.gmra.mxu0 %v63
  %v168 = vpop.f32.mrf.mxu0
  %v169 = vadd.f32 %v41, %v168
  %v170 = vpop.f32.mrf.mxu0
  %171 = vmatprep.mubr.f32.mxu0 0.0
  %172 = vmatmul.mubr.f32.gmra.mxu0 %v66
  %v173 = vpop.f32.mrf.mxu0
  %v174 = vadd.f32 %v41, %v173
  %v175 = vpop.f32.mrf.mxu0
  %176 = vdwg.mxu0
  %vm177 = vcmask 261120
  %v179 = vsel %vm177, 0.0, 0
  %181 = vmatprep.subr.mxu0 0.0
  %182 = vmatpush1.msra.mxu0 0.0
  %183 = vmatprep.subr.mxu0 0.0
  %184 = vmatpush1.msra.mxu0 0.0
  %185 = vmatprep.subr.mxu0 0.0
  %186 = vmatpush1.msra.mxu0 0.0
  %187 = vmatprep.subr.mxu0 0.0
  %188 = vmatpush1.msra.mxu0 0.0
  %189 = vmatprep.subr.mxu0 0.0
  %190 = vmatpush1.msra.mxu0 0.0
  %191 = vmatprep.subr.mxu0 0.0
  %192 = vmatpush1.msra.mxu0 0.0
  %193 = vmatprep.subr.mxu0 0.0
  %194 = vmatpush1.msra.mxu0 0.0
  %195 = vmatprep.subr.mxu0 0.0
  %196 = vmatpush1.msra.mxu0 0.0
  %197 = vmatprep.subr.mxu0 0.0
  %198 = vmatpush1.msra.mxu0 0.0
  %199 = vmatprep.subr.mxu0 0.0
  %200 = vmatpush1.msra.mxu0 0.0
  %201 = vmatprep.subr.mxu0 0.0
  %202 = vmatpush1.msra.mxu0 0.0
  %203 = vmatprep.subr.mxu0 0.0
  %204 = vmatpush1.msra.mxu0 0.0
  %205 = vmatprep.subr.mxu0 0.0
  %206 = vmatpush1.msra.mxu0 %v26
  %207 = vmatprep.subr.mxu0 0.0
  %208 = vmatpush1.msra.mxu0 %v25
  %209 = vmatprep.subr.mxu0 0.0
  %210 = vmatpush1.msra.mxu0 %v24
  %211 = vmatprep.subr.mxu0 0.0
  %212 = vmatpush1.msra.mxu0 %v23
  %213 = vmatprep.subr.mxu0 0.0
  %214 = vmatpush2.msra.mxu0 0.0
  %215 = vmatprep.subr.mxu0 0.0
  %216 = vmatpush2.msra.mxu0 0.0
  %217 = vmatprep.subr.mxu0 0.0
  %218 = vmatpush2.msra.mxu0 0.0
  %219 = vmatprep.subr.mxu0 0.0
  %220 = vmatpush2.msra.mxu0 0.0
  %221 = vmatprep.subr.mxu0 0.0
  %222 = vmatpush2.msra.mxu0 0.0
  %223 = vmatprep.subr.mxu0 0.0
  %224 = vmatpush2.msra.mxu0 0.0
  %225 = vmatprep.subr.mxu0 0.0
  %226 = vmatpush2.msra.mxu0 0.0
  %227 = vmatprep.subr.mxu0 0.0
  %228 = vmatpush2.msra.mxu0 0.0
  %229 = vmatprep.subr.mxu0 0.0
  %230 = vmatpush2.msra.mxu0 0.0
  %231 = vmatprep.subr.mxu0 0.0
  %232 = vmatpush2.msra.mxu0 0.0
  %233 = vmatprep.subr.mxu0 0.0
  %234 = vmatpush2.msra.mxu0 0.0
  %235 = vmatprep.subr.mxu0 0.0
  %236 = vmatpush2.msra.mxu0 0.0
  %237 = vmatprep.subr.mxu0 0.0
  %238 = vmatpush2.msra.mxu0 0.0
  %239 = vmatprep.subr.mxu0 0.0
  %240 = vmatpush2.msra.mxu0 0.0
  %241 = vmatprep.subr.mxu0 0.0
  %242 = vmatpush2.msra.mxu0 0.0
  %243 = vmatprep.subr.mxu0 0.0
  %244 = vmatpush2.msra.mxu0 0.0
  %245 = vmatprep.mubr.f32.mxu0 0.0
  %246 = vmatmul.mubr.f32.gmra.mxu0 %v179
  %v247 = vpop.f32.mrf.mxu0
  %v248 = vadd.f32 0.0, %v247
  %v249 = vpop.f32.mrf.mxu0
  %250 = vdwg.mxu0
  %v252 = vrot.slane %v248, 1
  %v253 = vrot.slane %v248, 2
  %v254 = vrot.slane %v248, 3
  %v255 = vrot.slane %v248, 4
  %v256 = vrot.slane %v248, 5
  %v257 = vrot.slane %v248, 6
  %v258 = vrot.slane %v248, 7
  %v267 = vadd.f32 %v139, %v248
  %v268 = vadd.f32 %v144, %v252
  %v269 = vadd.f32 %v149, %v253
  %v270 = vadd.f32 %v154, %v254
  %v271 = vadd.f32 %v159, %v255
  %v272 = vadd.f32 %v164, %v256
  %v273 = vadd.f32 %v169, %v257
  %v274 = vadd.f32 %v174, %v258
  %v275 = vxor.u32 %v267, 2147483648
  %v276 = vxor.u32 %v268, 2147483648
  %v277 = vxor.u32 %v269, 2147483648
  %v278 = vxor.u32 %v270, 2147483648
  %v279 = vxor.u32 %v271, 2147483648
  %v280 = vxor.u32 %v272, 2147483648
  %v281 = vxor.u32 %v273, 2147483648
  %v282 = vxor.u32 %v274, 2147483648
  %v283 = vmul.f32 %v275, 1.442695
  %v284 = vpow.pop %v283
  %v285 = vmul.f32 %v276, 1.442695
  %v286 = vpow.pop %v285
  %v287 = vmul.f32 %v277, 1.442695
  %v288 = vpow.pop %v287
  %v289 = vmul.f32 %v278, 1.442695
  %v290 = vpow.pop %v289
  %v291 = vmul.f32 %v279, 1.442695
  %v292 = vpow.pop %v291
  %v293 = vmul.f32 %v280, 1.442695
  %v294 = vpow.pop %v293
  %v295 = vmul.f32 %v281, 1.442695
  %v296 = vpow.pop %v295
  %v297 = vmul.f32 %v282, 1.442695
  %v298 = vpow.pop %v297
  %v299 = vadd.f32 %v284, 1.0
  %v300 = vadd.f32 %v286, 1.0
  %v301 = vadd.f32 %v288, 1.0
  %v302 = vadd.f32 %v290, 1.0
  %v303 = vadd.f32 %v292, 1.0
  %v304 = vadd.f32 %v294, 1.0
  %v305 = vadd.f32 %v296, 1.0
  %v306 = vadd.f32 %v298, 1.0
  %v307 = vrcp.pop %v299
  %v308 = vmul.f32 1.0, %v307
  %v309 = vrcp.pop %v300
  %v310 = vmul.f32 1.0, %v309
  %v311 = vrcp.pop %v301
  %v312 = vmul.f32 1.0, %v311
  %v313 = vrcp.pop %v302
  %v314 = vmul.f32 1.0, %v313
  %v315 = vrcp.pop %v303
  %v316 = vmul.f32 1.0, %v315
  %v317 = vrcp.pop %v304
  %v318 = vmul.f32 1.0, %v317
  %v319 = vrcp.pop %v305
  %v320 = vmul.f32 1.0, %v319
  %v321 = vrcp.pop %v306
  %v322 = vmul.f32 1.0, %v321
  %v323 = vtanh.pop %v267
  %v324 = vtanh.pop %v268
  %v325 = vtanh.pop %v269
  %v326 = vtanh.pop %v270
  %v327 = vtanh.pop %v271
  %v328 = vtanh.pop %v272
  %v329 = vtanh.pop %v273
  %v330 = vtanh.pop %v274
  %v331 = vmul.f32 %v308, 0.0
  %v332 = vmul.f32 %v310, 0.0
  %v333 = vmul.f32 %v312, 0.0
  %v334 = vmul.f32 %v314, 0.0
  %v335 = vmul.f32 %v316, 0.0
  %v336 = vmul.f32 %v318, 0.0
  %v337 = vmul.f32 %v320, 0.0
  %v338 = vmul.f32 %v322, 0.0
  %347 = vrot.lane.b32.xlu0 %v323, 32
  %v348 = vpop.permute.xlu0 %347
  %349 = vrot.lane.b32.xlu0 %v324, 32
  %v350 = vpop.permute.xlu0 %349
  %351 = vrot.lane.b32.xlu0 %v325, 32
  %v352 = vpop.permute.xlu0 %351
  %353 = vrot.lane.b32.xlu0 %v326, 32
  %v354 = vpop.permute.xlu0 %353
  %355 = vrot.lane.b32.xlu0 %v327, 32
  %v356 = vpop.permute.xlu0 %355
  %357 = vrot.lane.b32.xlu0 %v328, 32
  %v358 = vpop.permute.xlu0 %357
  %359 = vrot.lane.b32.xlu0 %v329, 32
  %v360 = vpop.permute.xlu0 %359
  %361 = vrot.lane.b32.xlu0 %v330, 32
  %v362 = vpop.permute.xlu0 %361
  %v371 = vmul.f32 %v308, %v348
  %v372 = vmul.f32 %v310, %v350
  %v373 = vmul.f32 %v312, %v352
  %v374 = vmul.f32 %v314, %v354
  %v375 = vmul.f32 %v316, %v356
  %v376 = vmul.f32 %v318, %v358
  %v377 = vmul.f32 %v320, %v360
  %v378 = vmul.f32 %v322, %v362
  %387 = vrot.lane.b32.xlu0 %v371, 32
  %v388 = vpop.permute.xlu0 %387
  %389 = vrot.lane.b32.xlu0 %v372, 32
  %v390 = vpop.permute.xlu0 %389
  %391 = vrot.lane.b32.xlu0 %v373, 32
  %v392 = vpop.permute.xlu0 %391
  %393 = vrot.lane.b32.xlu0 %v374, 32
  %v394 = vpop.permute.xlu0 %393
  %395 = vrot.lane.b32.xlu0 %v375, 32
  %v396 = vpop.permute.xlu0 %395
  %397 = vrot.lane.b32.xlu0 %v376, 32
  %v398 = vpop.permute.xlu0 %397
  %399 = vrot.lane.b32.xlu0 %v377, 32
  %v400 = vpop.permute.xlu0 %399
  %401 = vrot.lane.b32.xlu0 %v378, 32
  %v402 = vpop.permute.xlu0 %401
  %v411 = vadd.f32 %v331, %v388
  %v412 = vadd.f32 %v332, %v390
  %v413 = vadd.f32 %v333, %v392
  %v414 = vadd.f32 %v334, %v394
  %v415 = vadd.f32 %v335, %v396
  %v416 = vadd.f32 %v336, %v398
  %v417 = vadd.f32 %v337, %v400
  %v418 = vadd.f32 %v338, %v402
  %v419 = vtanh.pop %v411
  %v420 = vtanh.pop %v412
  %v421 = vtanh.pop %v413
  %v422 = vtanh.pop %v414
  %v423 = vtanh.pop %v415
  %v424 = vtanh.pop %v416
  %v425 = vtanh.pop %v417
  %v426 = vtanh.pop %v418
  %435 = vrot.lane.b32.xlu0 %v419, 32
  %v436 = vpop.permute.xlu0 %435
  %437 = vrot.lane.b32.xlu0 %v420, 32
  %v438 = vpop.permute.xlu0 %437
  %439 = vrot.lane.b32.xlu0 %v421, 32
  %v440 = vpop.permute.xlu0 %439
  %441 = vrot.lane.b32.xlu0 %v422, 32
  %v442 = vpop.permute.xlu0 %441
  %443 = vrot.lane.b32.xlu0 %v423, 32
  %v444 = vpop.permute.xlu0 %443
  %445 = vrot.lane.b32.xlu0 %v424, 32
  %v446 = vpop.permute.xlu0 %445
  %447 = vrot.lane.b32.xlu0 %v425, 32
  %v448 = vpop.permute.xlu0 %447
  %449 = vrot.lane.b32.xlu0 %v426, 32
  %v450 = vpop.permute.xlu0 %449
  %v459 = vmul.f32 %v308, %v436
  %v460 = vmul.f32 %v310, %v438
  %v461 = vmul.f32 %v312, %v440
  %v462 = vmul.f32 %v314, %v442
  %v463 = vmul.f32 %v316, %v444
  %v464 = vmul.f32 %v318, %v446
  %v465 = vmul.f32 %v320, %v448
  %v466 = vmul.f32 %v322, %v450
  %v475 = vrot.slane %v460, 7
  %vm476 = vcmask 1041409
  %v477 = vsel %vm476, %v475, %v459
  %v478 = vrot.slane %v461, 6
  %vm479 = vcmask 1042434
  %v480 = vsel %vm479, %v478, %v477
  %v481 = vrot.slane %v462, 5
  %vm482 = vcmask 1043459
  %v483 = vsel %vm482, %v481, %v480
  %v484 = vrot.slane %v463, 4
  %vm485 = vcmask 1044484
  %v486 = vsel %vm485, %v484, %v483
  %v487 = vrot.slane %v464, 3
  %vm488 = vcmask 1045509
  %v489 = vsel %vm488, %v487, %v486
  %v490 = vrot.slane %v465, 2
  %vm491 = vcmask 1046534
  %v492 = vsel %vm491, %v490, %v489
  %v493 = vrot.slane %v466, 1
  %vm494 = vcmask 1047559
  %v495 = vsel %vm494, %v493, %v492
  %496 = vrot.lane.b32.xlu0 %v495, 64
  %v497 = vpop.permute.xlu0 %496
  %v498 = vsel %vm177, %v497, 0
  %500 = vmatprep.subr.mxu0 0.0
  %501 = vmatpush1.msra.mxu0 0.0
  %502 = vmatprep.subr.mxu0 0.0
  %503 = vmatpush1.msra.mxu0 0.0
  %504 = vmatprep.subr.mxu0 0.0
  %505 = vmatpush1.msra.mxu0 0.0
  %506 = vmatprep.subr.mxu0 0.0
  %507 = vmatpush1.msra.mxu0 0.0
  %508 = vmatprep.subr.mxu0 0.0
  %509 = vmatpush1.msra.mxu0 0.0
  %510 = vmatprep.subr.mxu0 0.0
  %511 = vmatpush1.msra.mxu0 0.0
  %512 = vmatprep.subr.mxu0 0.0
  %513 = vmatpush1.msra.mxu0 0.0
  %514 = vmatprep.subr.mxu0 0.0
  %515 = vmatpush1.msra.mxu0 0.0
  %516 = vmatprep.subr.mxu0 0.0
  %517 = vmatpush1.msra.mxu0 0.0
  %518 = vmatprep.subr.mxu0 0.0
  %519 = vmatpush1.msra.mxu0 0.0
  %520 = vmatprep.subr.mxu0 0.0
  %521 = vmatpush1.msra.mxu0 0.0
  %522 = vmatprep.subr.mxu0 0.0
  %523 = vmatpush1.msra.mxu0 0.0
  %524 = vmatprep.subr.mxu0 0.0
  %525 = vmatpush1.msra.mxu0 %v26
  %526 = vmatprep.subr.mxu0 0.0
  %527 = vmatpush1.msra.mxu0 %v25
  %528 = vmatprep.subr.mxu0 0.0
  %529 = vmatpush1.msra.mxu0 %v24
  %530 = vmatprep.subr.mxu0 0.0
  %531 = vmatpush1.msra.mxu0 %v23
  %532 = vmatprep.subr.mxu0 0.0
  %533 = vmatpush2.msra.mxu0 0.0
  %534 = vmatprep.subr.mxu0 0.0
  %535 = vmatpush2.msra.mxu0 0.0
  %536 = vmatprep.subr.mxu0 0.0
  %537 = vmatpush2.msra.mxu0 0.0
  %538 = vmatprep.subr.mxu0 0.0
  %539 = vmatpush2.msra.mxu0 0.0
  %540 = vmatprep.subr.mxu0 0.0
  %541 = vmatpush2.msra.mxu0 0.0
  %542 = vmatprep.subr.mxu0 0.0
  %543 = vmatpush2.msra.mxu0 0.0
  %544 = vmatprep.subr.mxu0 0.0
  %545 = vmatpush2.msra.mxu0 0.0
  %546 = vmatprep.subr.mxu0 0.0
  %547 = vmatpush2.msra.mxu0 0.0
  %548 = vmatprep.subr.mxu0 0.0
  %549 = vmatpush2.msra.mxu0 0.0
  %550 = vmatprep.subr.mxu0 0.0
  %551 = vmatpush2.msra.mxu0 0.0
  %552 = vmatprep.subr.mxu0 0.0
  %553 = vmatpush2.msra.mxu0 0.0
  %554 = vmatprep.subr.mxu0 0.0
  %555 = vmatpush2.msra.mxu0 0.0
  %556 = vmatprep.subr.mxu0 0.0
  %557 = vmatpush2.msra.mxu0 0.0
  %558 = vmatprep.subr.mxu0 0.0
  %559 = vmatpush2.msra.mxu0 0.0
  %560 = vmatprep.subr.mxu0 0.0
  %561 = vmatpush2.msra.mxu0 0.0
  %562 = vmatprep.subr.mxu0 0.0
  %563 = vmatpush2.msra.mxu0 0.0
  %564 = vmatprep.mubr.f32.mxu0 0.0
  %565 = vmatmul.mubr.f32.gmra.mxu0 %v498
  %v566 = vpop.f32.mrf.mxu0
  %v567 = vadd.f32 0.0, %v566
  %v568 = vpop.f32.mrf.mxu0
  %569 = vdwg.mxu0
  %v571 = vrot.slane %v567, 7
  %v572 = vrot.slane %v567, 1
  %v573 = vrot.slane %v567, 2
  %v574 = vrot.slane %v567, 3
  %v575 = vrot.slane %v567, 4
  %v576 = vrot.slane %v567, 5
  %v577 = vrot.slane %v567, 6
  %v586 = vadd.f32 %v139, %v571
  %v587 = vadd.f32 %v144, %v567
  %v588 = vadd.f32 %v149, %v572
  %v589 = vadd.f32 %v154, %v573
  %v590 = vadd.f32 %v159, %v574
  %v591 = vadd.f32 %v164, %v575
  %v592 = vadd.f32 %v169, %v576
  %v593 = vadd.f32 %v174, %v577
  %v594 = vxor.u32 %v586, 2147483648
  %v595 = vxor.u32 %v587, 2147483648
  %v596 = vxor.u32 %v588, 2147483648
  %v597 = vxor.u32 %v589, 2147483648
  %v598 = vxor.u32 %v590, 2147483648
  %v599 = vxor.u32 %v591, 2147483648
  %v600 = vxor.u32 %v592, 2147483648
  %v601 = vxor.u32 %v593, 2147483648
  %v602 = vmul.f32 %v594, 1.442695
  %v603 = vpow.pop %v602
  %v604 = vmul.f32 %v595, 1.442695
  %v605 = vpow.pop %v604
  %v606 = vmul.f32 %v596, 1.442695
  %v607 = vpow.pop %v606
  %v608 = vmul.f32 %v597, 1.442695
  %v609 = vpow.pop %v608
  %v610 = vmul.f32 %v598, 1.442695
  %v611 = vpow.pop %v610
  %v612 = vmul.f32 %v599, 1.442695
  %v613 = vpow.pop %v612
  %v614 = vmul.f32 %v600, 1.442695
  %v615 = vpow.pop %v614
  %v616 = vmul.f32 %v601, 1.442695
  %v617 = vpow.pop %v616
  %v618 = vadd.f32 %v603, 1.0
  %v619 = vadd.f32 %v605, 1.0
  %v620 = vadd.f32 %v607, 1.0
  %v621 = vadd.f32 %v609, 1.0
  %v622 = vadd.f32 %v611, 1.0
  %v623 = vadd.f32 %v613, 1.0
  %v624 = vadd.f32 %v615, 1.0
  %v625 = vadd.f32 %v617, 1.0
  %v626 = vrcp.pop %v618
  %v627 = vmul.f32 1.0, %v626
  %v628 = vrcp.pop %v619
  %v629 = vmul.f32 1.0, %v628
  %v630 = vrcp.pop %v620
  %v631 = vmul.f32 1.0, %v630
  %v632 = vrcp.pop %v621
  %v633 = vmul.f32 1.0, %v632
  %v634 = vrcp.pop %v622
  %v635 = vmul.f32 1.0, %v634
  %v636 = vrcp.pop %v623
  %v637 = vmul.f32 1.0, %v636
  %v638 = vrcp.pop %v624
  %v639 = vmul.f32 1.0, %v638
  %v640 = vrcp.pop %v625
  %v641 = vmul.f32 1.0, %v640
  %v642 = vtanh.pop %v586
  %v643 = vtanh.pop %v587
  %v644 = vtanh.pop %v588
  %v645 = vtanh.pop %v589
  %v646 = vtanh.pop %v590
  %v647 = vtanh.pop %v591
  %v648 = vtanh.pop %v592
  %v649 = vtanh.pop %v593
  %v658 = vrot.slane %v411, 7
  %v659 = vrot.slane %v412, 7
  %v660 = vrot.slane %v413, 7
  %v661 = vrot.slane %v414, 7
  %v662 = vrot.slane %v415, 7
  %v663 = vrot.slane %v416, 7
  %v664 = vrot.slane %v417, 7
  %v665 = vrot.slane %v418, 7
  %v674 = vmul.f32 %v627, %v658
  %v675 = vmul.f32 %v629, %v659
  %v676 = vmul.f32 %v631, %v660
  %v677 = vmul.f32 %v633, %v661
  %v678 = vmul.f32 %v635, %v662
  %v679 = vmul.f32 %v637, %v663
  %v680 = vmul.f32 %v639, %v664
  %v681 = vmul.f32 %v641, %v665
  %690 = vrot.lane.b32.xlu0 %v642, 32
  %v691 = vpop.permute.xlu0 %690
  %692 = vrot.lane.b32.xlu0 %v643, 32
  %v693 = vpop.permute.xlu0 %692
  %694 = vrot.lane.b32.xlu0 %v644, 32
  %v695 = vpop.permute.xlu0 %694
  %696 = vrot.lane.b32.xlu0 %v645, 32
  %v697 = vpop.permute.xlu0 %696
  %698 = vrot.lane.b32.xlu0 %v646, 32
  %v699 = vpop.permute.xlu0 %698
  %700 = vrot.lane.b32.xlu0 %v647, 32
  %v701 = vpop.permute.xlu0 %700
  %702 = vrot.lane.b32.xlu0 %v648, 32
  %v703 = vpop.permute.xlu0 %702
  %704 = vrot.lane.b32.xlu0 %v649, 32
  %v705 = vpop.permute.xlu0 %704
  %v714 = vmul.f32 %v627, %v691
  %v715 = vmul.f32 %v629, %v693
  %v716 = vmul.f32 %v631, %v695
  %v717 = vmul.f32 %v633, %v697
  %v718 = vmul.f32 %v635, %v699
  %v719 = vmul.f32 %v637, %v701
  %v720 = vmul.f32 %v639, %v703
  %v721 = vmul.f32 %v641, %v705
  %730 = vrot.lane.b32.xlu0 %v714, 32
  %v731 = vpop.permute.xlu0 %730
  %732 = vrot.lane.b32.xlu0 %v715, 32
  %v733 = vpop.permute.xlu0 %732
  %734 = vrot.lane.b32.xlu0 %v716, 32
  %v735 = vpop.permute.xlu0 %734
  %736 = vrot.lane.b32.xlu0 %v717, 32
  %v737 = vpop.permute.xlu0 %736
  %738 = vrot.lane.b32.xlu0 %v718, 32
  %v739 = vpop.permute.xlu0 %738
  %740 = vrot.lane.b32.xlu0 %v719, 32
  %v741 = vpop.permute.xlu0 %740
  %742 = vrot.lane.b32.xlu0 %v720, 32
  %v743 = vpop.permute.xlu0 %742
  %744 = vrot.lane.b32.xlu0 %v721, 32
  %v745 = vpop.permute.xlu0 %744
  %v754 = vadd.f32 %v674, %v731
  %v755 = vadd.f32 %v675, %v733
  %v756 = vadd.f32 %v676, %v735
  %v757 = vadd.f32 %v677, %v737
  %v758 = vadd.f32 %v678, %v739
  %v759 = vadd.f32 %v679, %v741
  %v760 = vadd.f32 %v680, %v743
  %v761 = vadd.f32 %v681, %v745
  %v762 = vtanh.pop %v754
  %v763 = vtanh.pop %v755
  %v764 = vtanh.pop %v756
  %v765 = vtanh.pop %v757
  %v766 = vtanh.pop %v758
  %v767 = vtanh.pop %v759
  %v768 = vtanh.pop %v760
  %v769 = vtanh.pop %v761
  %778 = vrot.lane.b32.xlu0 %v762, 32
  %v779 = vpop.permute.xlu0 %778
  %780 = vrot.lane.b32.xlu0 %v763, 32
  %v781 = vpop.permute.xlu0 %780
  %782 = vrot.lane.b32.xlu0 %v764, 32
  %v783 = vpop.permute.xlu0 %782
  %784 = vrot.lane.b32.xlu0 %v765, 32
  %v785 = vpop.permute.xlu0 %784
  %786 = vrot.lane.b32.xlu0 %v766, 32
  %v787 = vpop.permute.xlu0 %786
  %788 = vrot.lane.b32.xlu0 %v767, 32
  %v789 = vpop.permute.xlu0 %788
  %790 = vrot.lane.b32.xlu0 %v768, 32
  %v791 = vpop.permute.xlu0 %790
  %792 = vrot.lane.b32.xlu0 %v769, 32
  %v793 = vpop.permute.xlu0 %792
  %v802 = vmul.f32 %v627, %v779
  %v803 = vmul.f32 %v629, %v781
  %v804 = vmul.f32 %v631, %v783
  %v805 = vmul.f32 %v633, %v785
  %v806 = vmul.f32 %v635, %v787
  %v807 = vmul.f32 %v637, %v789
  %v808 = vmul.f32 %v639, %v791
  %v809 = vmul.f32 %v641, %v793
  %v818 = vrot.slane %v802, 1
  %v819 = vsel %vm476, %v803, %v818
  %v820 = vrot.slane %v804, 7
  %v821 = vsel %vm479, %v820, %v819
  %v822 = vrot.slane %v805, 6
  %v823 = vsel %vm482, %v822, %v821
  %v824 = vrot.slane %v806, 5
  %v825 = vsel %vm485, %v824, %v823
  %v826 = vrot.slane %v807, 4
  %v827 = vsel %vm488, %v826, %v825
  %v828 = vrot.slane %v808, 3
  %v829 = vsel %vm491, %v828, %v827
  %v830 = vrot.slane %v809, 2
  %v831 = vsel %vm494, %v830, %v829
  %832 = vrot.lane.b32.xlu0 %v831, 64
  %v833 = vpop.permute.xlu0 %832
  %v834 = vsel %vm177, %v833, 0
  %836 = vmatprep.subr.mxu0 0.0
  %837 = vmatpush1.msra.mxu0 0.0
  %838 = vmatprep.subr.mxu0 0.0
  %839 = vmatpush1.msra.mxu0 0.0
  %840 = vmatprep.subr.mxu0 0.0
  %841 = vmatpush1.msra.mxu0 0.0
  %842 = vmatprep.subr.mxu0 0.0
  %843 = vmatpush1.msra.mxu0 0.0
  %844 = vmatprep.subr.mxu0 0.0
  %845 = vmatpush1.msra.mxu0 0.0
  %846 = vmatprep.subr.mxu0 0.0
  %847 = vmatpush1.msra.mxu0 0.0
  %848 = vmatprep.subr.mxu0 0.0
  %849 = vmatpush1.msra.mxu0 0.0
  %850 = vmatprep.subr.mxu0 0.0
  %851 = vmatpush1.msra.mxu0 0.0
  %852 = vmatprep.subr.mxu0 0.0
  %853 = vmatpush1.msra.mxu0 0.0
  %854 = vmatprep.subr.mxu0 0.0
  %855 = vmatpush1.msra.mxu0 0.0
  %856 = vmatprep.subr.mxu0 0.0
  %857 = vmatpush1.msra.mxu0 0.0
  %858 = vmatprep.subr.mxu0 0.0
  %859 = vmatpush1.msra.mxu0 0.0
  %860 = vmatprep.subr.mxu0 0.0
  %861 = vmatpush1.msra.mxu0 %v26
  %862 = vmatprep.subr.mxu0 0.0
  %863 = vmatpush1.msra.mxu0 %v25
  %864 = vmatprep.subr.mxu0 0.0
  %865 = vmatpush1.msra.mxu0 %v24
  %866 = vmatprep.subr.mxu0 0.0
  %867 = vmatpush1.msra.mxu0 %v23
  %868 = vmatprep.subr.mxu0 0.0
  %869 = vmatpush2.msra.mxu0 0.0
  %870 = vmatprep.subr.mxu0 0.0
  %871 = vmatpush2.msra.mxu0 0.0
  %872 = vmatprep.subr.mxu0 0.0
  %873 = vmatpush2.msra.mxu0 0.0
  %874 = vmatprep.subr.mxu0 0.0
  %875 = vmatpush2.msra.mxu0 0.0
  %876 = vmatprep.subr.mxu0 0.0
  %877 = vmatpush2.msra.mxu0 0.0
  %878 = vmatprep.subr.mxu0 0.0
  %879 = vmatpush2.msra.mxu0 0.0
  %880 = vmatprep.subr.mxu0 0.0
  %881 = vmatpush2.msra.mxu0 0.0
  %882 = vmatprep.subr.mxu0 0.0
  %883 = vmatpush2.msra.mxu0 0.0
  %884 = vmatprep.subr.mxu0 0.0
  %885 = vmatpush2.msra.mxu0 0.0
  %886 = vmatprep.subr.mxu0 0.0
  %887 = vmatpush2.msra.mxu0 0.0
  %888 = vmatprep.subr.mxu0 0.0
  %889 = vmatpush2.msra.mxu0 0.0
  %890 = vmatprep.subr.mxu0 0.0
  %891 = vmatpush2.msra.mxu0 0.0
  %892 = vmatprep.subr.mxu0 0.0
  %893 = vmatpush2.msra.mxu0 0.0
  %894 = vmatprep.subr.mxu0 0.0
  %895 = vmatpush2.msra.mxu0 0.0
  %896 = vmatprep.subr.mxu0 0.0
  %897 = vmatpush2.msra.mxu0 0.0
  %898 = vmatprep.subr.mxu0 0.0
  %899 = vmatpush2.msra.mxu0 0.0
  %900 = vmatprep.mubr.f32.mxu0 0.0
  %901 = vmatmul.mubr.f32.gmra.mxu0 %v834
  %v902 = vpop.f32.mrf.mxu0
  %v903 = vadd.f32 0.0, %v902
  %v904 = vpop.f32.mrf.mxu0
  %905 = vdwg.mxu0
  %v907 = vrot.slane %v903, 6
  %v908 = vrot.slane %v903, 7
  %v909 = vrot.slane %v903, 1
  %v910 = vrot.slane %v903, 2
  %v911 = vrot.slane %v903, 3
  %v912 = vrot.slane %v903, 4
  %v913 = vrot.slane %v903, 5
  %v922 = vadd.f32 %v139, %v907
  %v923 = vadd.f32 %v144, %v908
  %v924 = vadd.f32 %v149, %v903
  %v925 = vadd.f32 %v154, %v909
  %v926 = vadd.f32 %v159, %v910
  %v927 = vadd.f32 %v164, %v911
  %v928 = vadd.f32 %v169, %v912
  %v929 = vadd.f32 %v174, %v913
  %v930 = vxor.u32 %v922, 2147483648
  %v931 = vxor.u32 %v923, 2147483648
  %v932 = vxor.u32 %v924, 2147483648
  %v933 = vxor.u32 %v925, 2147483648
  %v934 = vxor.u32 %v926, 2147483648
  %v935 = vxor.u32 %v927, 2147483648
  %v936 = vxor.u32 %v928, 2147483648
  %v937 = vxor.u32 %v929, 2147483648
  %v938 = vmul.f32 %v930, 1.442695
  %v939 = vpow.pop %v938
  %v940 = vmul.f32 %v931, 1.442695
  %v941 = vpow.pop %v940
  %v942 = vmul.f32 %v932, 1.442695
  %v943 = vpow.pop %v942
  %v944 = vmul.f32 %v933, 1.442695
  %v945 = vpow.pop %v944
  %v946 = vmul.f32 %v934, 1.442695
  %v947 = vpow.pop %v946
  %v948 = vmul.f32 %v935, 1.442695
  %v949 = vpow.pop %v948
  %v950 = vmul.f32 %v936, 1.442695
  %v951 = vpow.pop %v950
  %v952 = vmul.f32 %v937, 1.442695
  %v953 = vpow.pop %v952
  %v954 = vadd.f32 %v939, 1.0
  %v955 = vadd.f32 %v941, 1.0
  %v956 = vadd.f32 %v943, 1.0
  %v957 = vadd.f32 %v945, 1.0
  %v958 = vadd.f32 %v947, 1.0
  %v959 = vadd.f32 %v949, 1.0
  %v960 = vadd.f32 %v951, 1.0
  %v961 = vadd.f32 %v953, 1.0
  %v962 = vrcp.pop %v954
  %v963 = vmul.f32 1.0, %v962
  %v964 = vrcp.pop %v955
  %v965 = vmul.f32 1.0, %v964
  %v966 = vrcp.pop %v956
  %v967 = vmul.f32 1.0, %v966
  %v968 = vrcp.pop %v957
  %v969 = vmul.f32 1.0, %v968
  %v970 = vrcp.pop %v958
  %v971 = vmul.f32 1.0, %v970
  %v972 = vrcp.pop %v959
  %v973 = vmul.f32 1.0, %v972
  %v974 = vrcp.pop %v960
  %v975 = vmul.f32 1.0, %v974
  %v976 = vrcp.pop %v961
  %v977 = vmul.f32 1.0, %v976
  %v978 = vtanh.pop %v922
  %v979 = vtanh.pop %v923
  %v980 = vtanh.pop %v924
  %v981 = vtanh.pop %v925
  %v982 = vtanh.pop %v926
  %v983 = vtanh.pop %v927
  %v984 = vtanh.pop %v928
  %v985 = vtanh.pop %v929
  %v994 = vrot.slane %v754, 7
  %v995 = vrot.slane %v755, 7
  %v996 = vrot.slane %v756, 7
  %v997 = vrot.slane %v757, 7
  %v998 = vrot.slane %v758, 7
  %v999 = vrot.slane %v759, 7
  %v1000 = vrot.slane %v760, 7
  %v1001 = vrot.slane %v761, 7
  %v1010 = vmul.f32 %v963, %v994
  %v1011 = vmul.f32 %v965, %v995
  %v1012 = vmul.f32 %v967, %v996
  %v1013 = vmul.f32 %v969, %v997
  %v1014 = vmul.f32 %v971, %v998
  %v1015 = vmul.f32 %v973, %v999
  %v1016 = vmul.f32 %v975, %v1000
  %v1017 = vmul.f32 %v977, %v1001
  %1026 = vrot.lane.b32.xlu0 %v978, 32
  %v1027 = vpop.permute.xlu0 %1026
  %1028 = vrot.lane.b32.xlu0 %v979, 32
  %v1029 = vpop.permute.xlu0 %1028
  %1030 = vrot.lane.b32.xlu0 %v980, 32
  %v1031 = vpop.permute.xlu0 %1030
  %1032 = vrot.lane.b32.xlu0 %v981, 32
  %v1033 = vpop.permute.xlu0 %1032
  %1034 = vrot.lane.b32.xlu0 %v982, 32
  %v1035 = vpop.permute.xlu0 %1034
  %1036 = vrot.lane.b32.xlu0 %v983, 32
  %v1037 = vpop.permute.xlu0 %1036
  %1038 = vrot.lane.b32.xlu0 %v984, 32
  %v1039 = vpop.permute.xlu0 %1038
  %1040 = vrot.lane.b32.xlu0 %v985, 32
  %v1041 = vpop.permute.xlu0 %1040
  %v1050 = vmul.f32 %v963, %v1027
  %v1051 = vmul.f32 %v965, %v1029
  %v1052 = vmul.f32 %v967, %v1031
  %v1053 = vmul.f32 %v969, %v1033
  %v1054 = vmul.f32 %v971, %v1035
  %v1055 = vmul.f32 %v973, %v1037
  %v1056 = vmul.f32 %v975, %v1039
  %v1057 = vmul.f32 %v977, %v1041
  %1066 = vrot.lane.b32.xlu0 %v1050, 32
  %v1067 = vpop.permute.xlu0 %1066
  %1068 = vrot.lane.b32.xlu0 %v1051, 32
  %v1069 = vpop.permute.xlu0 %1068
  %1070 = vrot.lane.b32.xlu0 %v1052, 32
  %v1071 = vpop.permute.xlu0 %1070
  %1072 = vrot.lane.b32.xlu0 %v1053, 32
  %v1073 = vpop.permute.xlu0 %1072
  %1074 = vrot.lane.b32.xlu0 %v1054, 32
  %v1075 = vpop.permute.xlu0 %1074
  %1076 = vrot.lane.b32.xlu0 %v1055, 32
  %v1077 = vpop.permute.xlu0 %1076
  %1078 = vrot.lane.b32.xlu0 %v1056, 32
  %v1079 = vpop.permute.xlu0 %1078
  %1080 = vrot.lane.b32.xlu0 %v1057, 32
  %v1081 = vpop.permute.xlu0 %1080
  %v1090 = vadd.f32 %v1010, %v1067
  %v1091 = vadd.f32 %v1011, %v1069
  %v1092 = vadd.f32 %v1012, %v1071
  %v1093 = vadd.f32 %v1013, %v1073
  %v1094 = vadd.f32 %v1014, %v1075
  %v1095 = vadd.f32 %v1015, %v1077
  %v1096 = vadd.f32 %v1016, %v1079
  %v1097 = vadd.f32 %v1017, %v1081
  %v1098 = vtanh.pop %v1090
  %v1099 = vtanh.pop %v1091
  %v1100 = vtanh.pop %v1092
  %v1101 = vtanh.pop %v1093
  %v1102 = vtanh.pop %v1094
  %v1103 = vtanh.pop %v1095
  %v1104 = vtanh.pop %v1096
  %v1105 = vtanh.pop %v1097
  %1114 = vrot.lane.b32.xlu0 %v1098, 32
  %v1115 = vpop.permute.xlu0 %1114
  %1116 = vrot.lane.b32.xlu0 %v1099, 32
  %v1117 = vpop.permute.xlu0 %1116
  %1118 = vrot.lane.b32.xlu0 %v1100, 32
  %v1119 = vpop.permute.xlu0 %1118
  %1120 = vrot.lane.b32.xlu0 %v1101, 32
  %v1121 = vpop.permute.xlu0 %1120
  %1122 = vrot.lane.b32.xlu0 %v1102, 32
  %v1123 = vpop.permute.xlu0 %1122
  %1124 = vrot.lane.b32.xlu0 %v1103, 32
  %v1125 = vpop.permute.xlu0 %1124
  %1126 = vrot.lane.b32.xlu0 %v1104, 32
  %v1127 = vpop.permute.xlu0 %1126
  %1128 = vrot.lane.b32.xlu0 %v1105, 32
  %v1129 = vpop.permute.xlu0 %1128
  %v1138 = vmul.f32 %v963, %v1115
  %v1139 = vmul.f32 %v965, %v1117
  %v1140 = vmul.f32 %v967, %v1119
  %v1141 = vmul.f32 %v969, %v1121
  %v1142 = vmul.f32 %v971, %v1123
  %v1143 = vmul.f32 %v973, %v1125
  %v1144 = vmul.f32 %v975, %v1127
  %v1145 = vmul.f32 %v977, %v1129
  %v1154 = vrot.slane %v1138, 2
  %v1155 = vrot.slane %v1139, 1
  %v1156 = vsel %vm476, %v1155, %v1154
  %v1157 = vsel %vm479, %v1140, %v1156
  %v1158 = vrot.slane %v1141, 7
  %v1159 = vsel %vm482, %v1158, %v1157
  %v1160 = vrot.slane %v1142, 6
  %v1161 = vsel %vm485, %v1160, %v1159
  %v1162 = vrot.slane %v1143, 5
  %v1163 = vsel %vm488, %v1162, %v1161
  %v1164 = vrot.slane %v1144, 4
  %v1165 = vsel %vm491, %v1164, %v1163
  %v1166 = vrot.slane %v1145, 3
  %v1167 = vsel %vm494, %v1166, %v1165
  %1168 = vrot.lane.b32.xlu0 %v1167, 64
  %v1169 = vpop.permute.xlu0 %1168
  %v1170 = vsel %vm177, %v1169, 0
  %1172 = vmatprep.subr.mxu0 0.0
  %1173 = vmatpush1.msra.mxu0 0.0
  %1174 = vmatprep.subr.mxu0 0.0
  %1175 = vmatpush1.msra.mxu0 0.0
  %1176 = vmatprep.subr.mxu0 0.0
  %1177 = vmatpush1.msra.mxu0 0.0
  %1178 = vmatprep.subr.mxu0 0.0
  %1179 = vmatpush1.msra.mxu0 0.0
  %1180 = vmatprep.subr.mxu0 0.0
  %1181 = vmatpush1.msra.mxu0 0.0
  %1182 = vmatprep.subr.mxu0 0.0
  %1183 = vmatpush1.msra.mxu0 0.0
  %1184 = vmatprep.subr.mxu0 0.0
  %1185 = vmatpush1.msra.mxu0 0.0
  %1186 = vmatprep.subr.mxu0 0.0
  %1187 = vmatpush1.msra.mxu0 0.0
  %1188 = vmatprep.subr.mxu0 0.0
  %1189 = vmatpush1.msra.mxu0 0.0
  %1190 = vmatprep.subr.mxu0 0.0
  %1191 = vmatpush1.msra.mxu0 0.0
  %1192 = vmatprep.subr.mxu0 0.0
  %1193 = vmatpush1.msra.mxu0 0.0
  %1194 = vmatprep.subr.mxu0 0.0
  %1195 = vmatpush1.msra.mxu0 0.0
  %1196 = vmatprep.subr.mxu0 0.0
  %1197 = vmatpush1.msra.mxu0 %v26
  %1198 = vmatprep.subr.mxu0 0.0
  %1199 = vmatpush1.msra.mxu0 %v25
  %1200 = vmatprep.subr.mxu0 0.0
  %1201 = vmatpush1.msra.mxu0 %v24
  %1202 = vmatprep.subr.mxu0 0.0
  %1203 = vmatpush1.msra.mxu0 %v23
  %1204 = vmatprep.subr.mxu0 0.0
  %1205 = vmatpush2.msra.mxu0 0.0
  %1206 = vmatprep.subr.mxu0 0.0
  %1207 = vmatpush2.msra.mxu0 0.0
  %1208 = vmatprep.subr.mxu0 0.0
  %1209 = vmatpush2.msra.mxu0 0.0
  %1210 = vmatprep.subr.mxu0 0.0
  %1211 = vmatpush2.msra.mxu0 0.0
  %1212 = vmatprep.subr.mxu0 0.0
  %1213 = vmatpush2.msra.mxu0 0.0
  %1214 = vmatprep.subr.mxu0 0.0
  %1215 = vmatpush2.msra.mxu0 0.0
  %1216 = vmatprep.subr.mxu0 0.0
  %1217 = vmatpush2.msra.mxu0 0.0
  %1218 = vmatprep.subr.mxu0 0.0
  %1219 = vmatpush2.msra.mxu0 0.0
  %1220 = vmatprep.subr.mxu0 0.0
  %1221 = vmatpush2.msra.mxu0 0.0
  %1222 = vmatprep.subr.mxu0 0.0
  %1223 = vmatpush2.msra.mxu0 0.0
  %1224 = vmatprep.subr.mxu0 0.0
  %1225 = vmatpush2.msra.mxu0 0.0
  %1226 = vmatprep.subr.mxu0 0.0
  %1227 = vmatpush2.msra.mxu0 0.0
  %1228 = vmatprep.subr.mxu0 0.0
  %1229 = vmatpush2.msra.mxu0 0.0
  %1230 = vmatprep.subr.mxu0 0.0
  %1231 = vmatpush2.msra.mxu0 0.0
  %1232 = vmatprep.subr.mxu0 0.0
  %1233 = vmatpush2.msra.mxu0 0.0
  %1234 = vmatprep.subr.mxu0 0.0
  %1235 = vmatpush2.msra.mxu0 0.0
  %1236 = vmatprep.mubr.f32.mxu0 0.0
  %1237 = vmatmul.mubr.f32.gmra.mxu0 %v1170
  %v1238 = vpop.f32.mrf.mxu0
  %v1239 = vadd.f32 0.0, %v1238
  %v1240 = vpop.f32.mrf.mxu0
  %1241 = vdwg.mxu0
  %v1243 = vrot.slane %v1239, 5
  %v1244 = vrot.slane %v1239, 6
  %v1245 = vrot.slane %v1239, 7
  %v1246 = vrot.slane %v1239, 1
  %v1247 = vrot.slane %v1239, 2
  %v1248 = vrot.slane %v1239, 3
  %v1249 = vrot.slane %v1239, 4
  %v1258 = vadd.f32 %v139, %v1243
  %v1259 = vadd.f32 %v144, %v1244
  %v1260 = vadd.f32 %v149, %v1245
  %v1261 = vadd.f32 %v154, %v1239
  %v1262 = vadd.f32 %v159, %v1246
  %v1263 = vadd.f32 %v164, %v1247
  %v1264 = vadd.f32 %v169, %v1248
  %v1265 = vadd.f32 %v174, %v1249
  %v1266 = vxor.u32 %v1258, 2147483648
  %v1267 = vxor.u32 %v1259, 2147483648
  %v1268 = vxor.u32 %v1260, 2147483648
  %v1269 = vxor.u32 %v1261, 2147483648
  %v1270 = vxor.u32 %v1262, 2147483648
  %v1271 = vxor.u32 %v1263, 2147483648
  %v1272 = vxor.u32 %v1264, 2147483648
  %v1273 = vxor.u32 %v1265, 2147483648
  %v1274 = vmul.f32 %v1266, 1.442695
  %v1275 = vpow.pop %v1274
  %v1276 = vmul.f32 %v1267, 1.442695
  %v1277 = vpow.pop %v1276
  %v1278 = vmul.f32 %v1268, 1.442695
  %v1279 = vpow.pop %v1278
  %v1280 = vmul.f32 %v1269, 1.442695
  %v1281 = vpow.pop %v1280
  %v1282 = vmul.f32 %v1270, 1.442695
  %v1283 = vpow.pop %v1282
  %v1284 = vmul.f32 %v1271, 1.442695
  %v1285 = vpow.pop %v1284
  %v1286 = vmul.f32 %v1272, 1.442695
  %v1287 = vpow.pop %v1286
  %v1288 = vmul.f32 %v1273, 1.442695
  %v1289 = vpow.pop %v1288
  %v1290 = vadd.f32 %v1275, 1.0
  %v1291 = vadd.f32 %v1277, 1.0
  %v1292 = vadd.f32 %v1279, 1.0
  %v1293 = vadd.f32 %v1281, 1.0
  %v1294 = vadd.f32 %v1283, 1.0
  %v1295 = vadd.f32 %v1285, 1.0
  %v1296 = vadd.f32 %v1287, 1.0
  %v1297 = vadd.f32 %v1289, 1.0
  %v1298 = vrcp.pop %v1290
  %v1299 = vmul.f32 1.0, %v1298
  %v1300 = vrcp.pop %v1291
  %v1301 = vmul.f32 1.0, %v1300
  %v1302 = vrcp.pop %v1292
  %v1303 = vmul.f32 1.0, %v1302
  %v1304 = vrcp.pop %v1293
  %v1305 = vmul.f32 1.0, %v1304
  %v1306 = vrcp.pop %v1294
  %v1307 = vmul.f32 1.0, %v1306
  %v1308 = vrcp.pop %v1295
  %v1309 = vmul.f32 1.0, %v1308
  %v1310 = vrcp.pop %v1296
  %v1311 = vmul.f32 1.0, %v1310
  %v1312 = vrcp.pop %v1297
  %v1313 = vmul.f32 1.0, %v1312
  %v1314 = vtanh.pop %v1258
  %v1315 = vtanh.pop %v1259
  %v1316 = vtanh.pop %v1260
  %v1317 = vtanh.pop %v1261
  %v1318 = vtanh.pop %v1262
  %v1319 = vtanh.pop %v1263
  %v1320 = vtanh.pop %v1264
  %v1321 = vtanh.pop %v1265
  %v1330 = vrot.slane %v1090, 7
  %v1331 = vrot.slane %v1091, 7
  %v1332 = vrot.slane %v1092, 7
  %v1333 = vrot.slane %v1093, 7
  %v1334 = vrot.slane %v1094, 7
  %v1335 = vrot.slane %v1095, 7
  %v1336 = vrot.slane %v1096, 7
  %v1337 = vrot.slane %v1097, 7
  %v1346 = vmul.f32 %v1299, %v1330
  %v1347 = vmul.f32 %v1301, %v1331
  %v1348 = vmul.f32 %v1303, %v1332
  %v1349 = vmul.f32 %v1305, %v1333
  %v1350 = vmul.f32 %v1307, %v1334
  %v1351 = vmul.f32 %v1309, %v1335
  %v1352 = vmul.f32 %v1311, %v1336
  %v1353 = vmul.f32 %v1313, %v1337
  %1362 = vrot.lane.b32.xlu0 %v1314, 32
  %v1363 = vpop.permute.xlu0 %1362
  %1364 = vrot.lane.b32.xlu0 %v1315, 32
  %v1365 = vpop.permute.xlu0 %1364
  %1366 = vrot.lane.b32.xlu0 %v1316, 32
  %v1367 = vpop.permute.xlu0 %1366
  %1368 = vrot.lane.b32.xlu0 %v1317, 32
  %v1369 = vpop.permute.xlu0 %1368
  %1370 = vrot.lane.b32.xlu0 %v1318, 32
  %v1371 = vpop.permute.xlu0 %1370
  %1372 = vrot.lane.b32.xlu0 %v1319, 32
  %v1373 = vpop.permute.xlu0 %1372
  %1374 = vrot.lane.b32.xlu0 %v1320, 32
  %v1375 = vpop.permute.xlu0 %1374
  %1376 = vrot.lane.b32.xlu0 %v1321, 32
  %v1377 = vpop.permute.xlu0 %1376
  %v1386 = vmul.f32 %v1299, %v1363
  %v1387 = vmul.f32 %v1301, %v1365
  %v1388 = vmul.f32 %v1303, %v1367
  %v1389 = vmul.f32 %v1305, %v1369
  %v1390 = vmul.f32 %v1307, %v1371
  %v1391 = vmul.f32 %v1309, %v1373
  %v1392 = vmul.f32 %v1311, %v1375
  %v1393 = vmul.f32 %v1313, %v1377
  %1402 = vrot.lane.b32.xlu0 %v1386, 32
  %v1403 = vpop.permute.xlu0 %1402
  %1404 = vrot.lane.b32.xlu0 %v1387, 32
  %v1405 = vpop.permute.xlu0 %1404
  %1406 = vrot.lane.b32.xlu0 %v1388, 32
  %v1407 = vpop.permute.xlu0 %1406
  %1408 = vrot.lane.b32.xlu0 %v1389, 32
  %v1409 = vpop.permute.xlu0 %1408
  %1410 = vrot.lane.b32.xlu0 %v1390, 32
  %v1411 = vpop.permute.xlu0 %1410
  %1412 = vrot.lane.b32.xlu0 %v1391, 32
  %v1413 = vpop.permute.xlu0 %1412
  %1414 = vrot.lane.b32.xlu0 %v1392, 32
  %v1415 = vpop.permute.xlu0 %1414
  %1416 = vrot.lane.b32.xlu0 %v1393, 32
  %v1417 = vpop.permute.xlu0 %1416
  %v1426 = vadd.f32 %v1346, %v1403
  %v1427 = vadd.f32 %v1347, %v1405
  %v1428 = vadd.f32 %v1348, %v1407
  %v1429 = vadd.f32 %v1349, %v1409
  %v1430 = vadd.f32 %v1350, %v1411
  %v1431 = vadd.f32 %v1351, %v1413
  %v1432 = vadd.f32 %v1352, %v1415
  %v1433 = vadd.f32 %v1353, %v1417
  %v1434 = vtanh.pop %v1426
  %v1435 = vtanh.pop %v1427
  %v1436 = vtanh.pop %v1428
  %v1437 = vtanh.pop %v1429
  %v1438 = vtanh.pop %v1430
  %v1439 = vtanh.pop %v1431
  %v1440 = vtanh.pop %v1432
  %v1441 = vtanh.pop %v1433
  %1450 = vrot.lane.b32.xlu0 %v1434, 32
  %v1451 = vpop.permute.xlu0 %1450
  %1452 = vrot.lane.b32.xlu0 %v1435, 32
  %v1453 = vpop.permute.xlu0 %1452
  %1454 = vrot.lane.b32.xlu0 %v1436, 32
  %v1455 = vpop.permute.xlu0 %1454
  %1456 = vrot.lane.b32.xlu0 %v1437, 32
  %v1457 = vpop.permute.xlu0 %1456
  %1458 = vrot.lane.b32.xlu0 %v1438, 32
  %v1459 = vpop.permute.xlu0 %1458
  %1460 = vrot.lane.b32.xlu0 %v1439, 32
  %v1461 = vpop.permute.xlu0 %1460
  %1462 = vrot.lane.b32.xlu0 %v1440, 32
  %v1463 = vpop.permute.xlu0 %1462
  %1464 = vrot.lane.b32.xlu0 %v1441, 32
  %v1465 = vpop.permute.xlu0 %1464
  %v1474 = vmul.f32 %v1299, %v1451
  %v1475 = vmul.f32 %v1301, %v1453
  %v1476 = vmul.f32 %v1303, %v1455
  %v1477 = vmul.f32 %v1305, %v1457
  %v1478 = vmul.f32 %v1307, %v1459
  %v1479 = vmul.f32 %v1309, %v1461
  %v1480 = vmul.f32 %v1311, %v1463
  %v1481 = vmul.f32 %v1313, %v1465
  %v1490 = vrot.slane %v1474, 3
  %v1491 = vrot.slane %v1475, 2
  %v1492 = vsel %vm476, %v1491, %v1490
  %v1493 = vrot.slane %v1476, 1
  %v1494 = vsel %vm479, %v1493, %v1492
  %v1495 = vsel %vm482, %v1477, %v1494
  %v1496 = vrot.slane %v1478, 7
  %v1497 = vsel %vm485, %v1496, %v1495
  %v1498 = vrot.slane %v1479, 6
  %v1499 = vsel %vm488, %v1498, %v1497
  %v1500 = vrot.slane %v1480, 5
  %v1501 = vsel %vm491, %v1500, %v1499
  %v1502 = vrot.slane %v1481, 4
  %v1503 = vsel %vm494, %v1502, %v1501
  %1504 = vrot.lane.b32.xlu0 %v1503, 64
  %v1505 = vpop.permute.xlu0 %1504
  %v1506 = vsel %vm177, %v1505, 0
  %1508 = vmatprep.subr.mxu0 0.0
  %1509 = vmatpush1.msra.mxu0 0.0
  %1510 = vmatprep.subr.mxu0 0.0
  %1511 = vmatpush1.msra.mxu0 0.0
  %1512 = vmatprep.subr.mxu0 0.0
  %1513 = vmatpush1.msra.mxu0 0.0
  %1514 = vmatprep.subr.mxu0 0.0
  %1515 = vmatpush1.msra.mxu0 0.0
  %1516 = vmatprep.subr.mxu0 0.0
  %1517 = vmatpush1.msra.mxu0 0.0
  %1518 = vmatprep.subr.mxu0 0.0
  %1519 = vmatpush1.msra.mxu0 0.0
  %1520 = vmatprep.subr.mxu0 0.0
  %1521 = vmatpush1.msra.mxu0 0.0
  %1522 = vmatprep.subr.mxu0 0.0
  %1523 = vmatpush1.msra.mxu0 0.0
  %1524 = vmatprep.subr.mxu0 0.0
  %1525 = vmatpush1.msra.mxu0 0.0
  %1526 = vmatprep.subr.mxu0 0.0
  %1527 = vmatpush1.msra.mxu0 0.0
  %1528 = vmatprep.subr.mxu0 0.0
  %1529 = vmatpush1.msra.mxu0 0.0
  %1530 = vmatprep.subr.mxu0 0.0
  %1531 = vmatpush1.msra.mxu0 0.0
  %1532 = vmatprep.subr.mxu0 0.0
  %1533 = vmatpush1.msra.mxu0 %v26
  %1534 = vmatprep.subr.mxu0 0.0
  %1535 = vmatpush1.msra.mxu0 %v25
  %1536 = vmatprep.subr.mxu0 0.0
  %1537 = vmatpush1.msra.mxu0 %v24
  %1538 = vmatprep.subr.mxu0 0.0
  %1539 = vmatpush1.msra.mxu0 %v23
  %1540 = vmatprep.subr.mxu0 0.0
  %1541 = vmatpush2.msra.mxu0 0.0
  %1542 = vmatprep.subr.mxu0 0.0
  %1543 = vmatpush2.msra.mxu0 0.0
  %1544 = vmatprep.subr.mxu0 0.0
  %1545 = vmatpush2.msra.mxu0 0.0
  %1546 = vmatprep.subr.mxu0 0.0
  %1547 = vmatpush2.msra.mxu0 0.0
  %1548 = vmatprep.subr.mxu0 0.0
  %1549 = vmatpush2.msra.mxu0 0.0
  %1550 = vmatprep.subr.mxu0 0.0
  %1551 = vmatpush2.msra.mxu0 0.0
  %1552 = vmatprep.subr.mxu0 0.0
  %1553 = vmatpush2.msra.mxu0 0.0
  %1554 = vmatprep.subr.mxu0 0.0
  %1555 = vmatpush2.msra.mxu0 0.0
  %1556 = vmatprep.subr.mxu0 0.0
  %1557 = vmatpush2.msra.mxu0 0.0
  %1558 = vmatprep.subr.mxu0 0.0
  %1559 = vmatpush2.msra.mxu0 0.0
  %1560 = vmatprep.subr.mxu0 0.0
  %1561 = vmatpush2.msra.mxu0 0.0
  %1562 = vmatprep.subr.mxu0 0.0
  %1563 = vmatpush2.msra.mxu0 0.0
  %1564 = vmatprep.subr.mxu0 0.0
  %1565 = vmatpush2.msra.mxu0 0.0
  %1566 = vmatprep.subr.mxu0 0.0
  %1567 = vmatpush2.msra.mxu0 0.0
  %1568 = vmatprep.subr.mxu0 0.0
  %1569 = vmatpush2.msra.mxu0 0.0
  %1570 = vmatprep.subr.mxu0 0.0
  %1571 = vmatpush2.msra.mxu0 0.0
  %1572 = vmatprep.mubr.f32.mxu0 0.0
  %1573 = vmatmul.mubr.f32.gmra.mxu0 %v1506
  %v1574 = vpop.f32.mrf.mxu0
  %v1575 = vadd.f32 0.0, %v1574
  %v1576 = vpop.f32.mrf.mxu0
  %1577 = vdwg.mxu0
  %v1579 = vrot.slane %v1575, 4
  %v1580 = vrot.slane %v1575, 5
  %v1581 = vrot.slane %v1575, 6
  %v1582 = vrot.slane %v1575, 7
  %v1583 = vrot.slane %v1575, 1
  %v1584 = vrot.slane %v1575, 2
  %v1585 = vrot.slane %v1575, 3
  %v1594 = vadd.f32 %v139, %v1579
  %v1595 = vadd.f32 %v144, %v1580
  %v1596 = vadd.f32 %v149, %v1581
  %v1597 = vadd.f32 %v154, %v1582
  %v1598 = vadd.f32 %v159, %v1575
  %v1599 = vadd.f32 %v164, %v1583
  %v1600 = vadd.f32 %v169, %v1584
  %v1601 = vadd.f32 %v174, %v1585
  %v1602 = vxor.u32 %v1594, 2147483648
  %v1603 = vxor.u32 %v1595, 2147483648
  %v1604 = vxor.u32 %v1596, 2147483648
  %v1605 = vxor.u32 %v1597, 2147483648
  %v1606 = vxor.u32 %v1598, 2147483648
  %v1607 = vxor.u32 %v1599, 2147483648
  %v1608 = vxor.u32 %v1600, 2147483648
  %v1609 = vxor.u32 %v1601, 2147483648
  %v1610 = vmul.f32 %v1602, 1.442695
  %v1611 = vpow.pop %v1610
  %v1612 = vmul.f32 %v1603, 1.442695
  %v1613 = vpow.pop %v1612
  %v1614 = vmul.f32 %v1604, 1.442695
  %v1615 = vpow.pop %v1614
  %v1616 = vmul.f32 %v1605, 1.442695
  %v1617 = vpow.pop %v1616
  %v1618 = vmul.f32 %v1606, 1.442695
  %v1619 = vpow.pop %v1618
  %v1620 = vmul.f32 %v1607, 1.442695
  %v1621 = vpow.pop %v1620
  %v1622 = vmul.f32 %v1608, 1.442695
  %v1623 = vpow.pop %v1622
  %v1624 = vmul.f32 %v1609, 1.442695
  %v1625 = vpow.pop %v1624
  %v1626 = vadd.f32 %v1611, 1.0
  %v1627 = vadd.f32 %v1613, 1.0
  %v1628 = vadd.f32 %v1615, 1.0
  %v1629 = vadd.f32 %v1617, 1.0
  %v1630 = vadd.f32 %v1619, 1.0
  %v1631 = vadd.f32 %v1621, 1.0
  %v1632 = vadd.f32 %v1623, 1.0
  %v1633 = vadd.f32 %v1625, 1.0
  %v1634 = vrcp.pop %v1626
  %v1635 = vmul.f32 1.0, %v1634
  %v1636 = vrcp.pop %v1627
  %v1637 = vmul.f32 1.0, %v1636
  %v1638 = vrcp.pop %v1628
  %v1639 = vmul.f32 1.0, %v1638
  %v1640 = vrcp.pop %v1629
  %v1641 = vmul.f32 1.0, %v1640
  %v1642 = vrcp.pop %v1630
  %v1643 = vmul.f32 1.0, %v1642
  %v1644 = vrcp.pop %v1631
  %v1645 = vmul.f32 1.0, %v1644
  %v1646 = vrcp.pop %v1632
  %v1647 = vmul.f32 1.0, %v1646
  %v1648 = vrcp.pop %v1633
  %v1649 = vmul.f32 1.0, %v1648
  %v1650 = vtanh.pop %v1594
  %v1651 = vtanh.pop %v1595
  %v1652 = vtanh.pop %v1596
  %v1653 = vtanh.pop %v1597
  %v1654 = vtanh.pop %v1598
  %v1655 = vtanh.pop %v1599
  %v1656 = vtanh.pop %v1600
  %v1657 = vtanh.pop %v1601
  %v1666 = vrot.slane %v1426, 7
  %v1667 = vrot.slane %v1427, 7
  %v1668 = vrot.slane %v1428, 7
  %v1669 = vrot.slane %v1429, 7
  %v1670 = vrot.slane %v1430, 7
  %v1671 = vrot.slane %v1431, 7
  %v1672 = vrot.slane %v1432, 7
  %v1673 = vrot.slane %v1433, 7
  %v1682 = vmul.f32 %v1635, %v1666
  %v1683 = vmul.f32 %v1637, %v1667
  %v1684 = vmul.f32 %v1639, %v1668
  %v1685 = vmul.f32 %v1641, %v1669
  %v1686 = vmul.f32 %v1643, %v1670
  %v1687 = vmul.f32 %v1645, %v1671
  %v1688 = vmul.f32 %v1647, %v1672
  %v1689 = vmul.f32 %v1649, %v1673
  %1698 = vrot.lane.b32.xlu0 %v1650, 32
  %v1699 = vpop.permute.xlu0 %1698
  %1700 = vrot.lane.b32.xlu0 %v1651, 32
  %v1701 = vpop.permute.xlu0 %1700
  %1702 = vrot.lane.b32.xlu0 %v1652, 32
  %v1703 = vpop.permute.xlu0 %1702
  %1704 = vrot.lane.b32.xlu0 %v1653, 32
  %v1705 = vpop.permute.xlu0 %1704
  %1706 = vrot.lane.b32.xlu0 %v1654, 32
  %v1707 = vpop.permute.xlu0 %1706
  %1708 = vrot.lane.b32.xlu0 %v1655, 32
  %v1709 = vpop.permute.xlu0 %1708
  %1710 = vrot.lane.b32.xlu0 %v1656, 32
  %v1711 = vpop.permute.xlu0 %1710
  %1712 = vrot.lane.b32.xlu0 %v1657, 32
  %v1713 = vpop.permute.xlu0 %1712
  %v1722 = vmul.f32 %v1635, %v1699
  %v1723 = vmul.f32 %v1637, %v1701
  %v1724 = vmul.f32 %v1639, %v1703
  %v1725 = vmul.f32 %v1641, %v1705
  %v1726 = vmul.f32 %v1643, %v1707
  %v1727 = vmul.f32 %v1645, %v1709
  %v1728 = vmul.f32 %v1647, %v1711
  %v1729 = vmul.f32 %v1649, %v1713
  %1738 = vrot.lane.b32.xlu0 %v1722, 32
  %v1739 = vpop.permute.xlu0 %1738
  %1740 = vrot.lane.b32.xlu0 %v1723, 32
  %v1741 = vpop.permute.xlu0 %1740
  %1742 = vrot.lane.b32.xlu0 %v1724, 32
  %v1743 = vpop.permute.xlu0 %1742
  %1744 = vrot.lane.b32.xlu0 %v1725, 32
  %v1745 = vpop.permute.xlu0 %1744
  %1746 = vrot.lane.b32.xlu0 %v1726, 32
  %v1747 = vpop.permute.xlu0 %1746
  %1748 = vrot.lane.b32.xlu0 %v1727, 32
  %v1749 = vpop.permute.xlu0 %1748
  %1750 = vrot.lane.b32.xlu0 %v1728, 32
  %v1751 = vpop.permute.xlu0 %1750
  %1752 = vrot.lane.b32.xlu0 %v1729, 32
  %v1753 = vpop.permute.xlu0 %1752
  %v1762 = vadd.f32 %v1682, %v1739
  %v1763 = vadd.f32 %v1683, %v1741
  %v1764 = vadd.f32 %v1684, %v1743
  %v1765 = vadd.f32 %v1685, %v1745
  %v1766 = vadd.f32 %v1686, %v1747
  %v1767 = vadd.f32 %v1687, %v1749
  %v1768 = vadd.f32 %v1688, %v1751
  %v1769 = vadd.f32 %v1689, %v1753
  %v1770 = vtanh.pop %v1762
  %v1771 = vtanh.pop %v1763
  %v1772 = vtanh.pop %v1764
  %v1773 = vtanh.pop %v1765
  %v1774 = vtanh.pop %v1766
  %v1775 = vtanh.pop %v1767
  %v1776 = vtanh.pop %v1768
  %v1777 = vtanh.pop %v1769
  %1786 = vrot.lane.b32.xlu0 %v1770, 32
  %v1787 = vpop.permute.xlu0 %1786
  %1788 = vrot.lane.b32.xlu0 %v1771, 32
  %v1789 = vpop.permute.xlu0 %1788
  %1790 = vrot.lane.b32.xlu0 %v1772, 32
  %v1791 = vpop.permute.xlu0 %1790
  %1792 = vrot.lane.b32.xlu0 %v1773, 32
  %v1793 = vpop.permute.xlu0 %1792
  %1794 = vrot.lane.b32.xlu0 %v1774, 32
  %v1795 = vpop.permute.xlu0 %1794
  %1796 = vrot.lane.b32.xlu0 %v1775, 32
  %v1797 = vpop.permute.xlu0 %1796
  %1798 = vrot.lane.b32.xlu0 %v1776, 32
  %v1799 = vpop.permute.xlu0 %1798
  %1800 = vrot.lane.b32.xlu0 %v1777, 32
  %v1801 = vpop.permute.xlu0 %1800
  %v1810 = vmul.f32 %v1635, %v1787
  %v1811 = vmul.f32 %v1637, %v1789
  %v1812 = vmul.f32 %v1639, %v1791
  %v1813 = vmul.f32 %v1641, %v1793
  %v1814 = vmul.f32 %v1643, %v1795
  %v1815 = vmul.f32 %v1645, %v1797
  %v1816 = vmul.f32 %v1647, %v1799
  %v1817 = vmul.f32 %v1649, %v1801
  %v1826 = vrot.slane %v1810, 4
  %v1827 = vrot.slane %v1811, 3
  %v1828 = vsel %vm476, %v1827, %v1826
  %v1829 = vrot.slane %v1812, 2
  %v1830 = vsel %vm479, %v1829, %v1828
  %v1831 = vrot.slane %v1813, 1
  %v1832 = vsel %vm482, %v1831, %v1830
  %v1833 = vsel %vm485, %v1814, %v1832
  %v1834 = vrot.slane %v1815, 7
  %v1835 = vsel %vm488, %v1834, %v1833
  %v1836 = vrot.slane %v1816, 6
  %v1837 = vsel %vm491, %v1836, %v1835
  %v1838 = vrot.slane %v1817, 5
  %v1839 = vsel %vm494, %v1838, %v1837
  %1840 = vrot.lane.b32.xlu0 %v1839, 64
  %v1841 = vpop.permute.xlu0 %1840
  %v1842 = vsel %vm177, %v1841, 0
  %1844 = vmatprep.subr.mxu0 0.0
  %1845 = vmatpush1.msra.mxu0 0.0
  %1846 = vmatprep.subr.mxu0 0.0
  %1847 = vmatpush1.msra.mxu0 0.0
  %1848 = vmatprep.subr.mxu0 0.0
  %1849 = vmatpush1.msra.mxu0 0.0
  %1850 = vmatprep.subr.mxu0 0.0
  %1851 = vmatpush1.msra.mxu0 0.0
  %1852 = vmatprep.subr.mxu0 0.0
  %1853 = vmatpush1.msra.mxu0 0.0
  %1854 = vmatprep.subr.mxu0 0.0
  %1855 = vmatpush1.msra.mxu0 0.0
  %1856 = vmatprep.subr.mxu0 0.0
  %1857 = vmatpush1.msra.mxu0 0.0
  %1858 = vmatprep.subr.mxu0 0.0
  %1859 = vmatpush1.msra.mxu0 0.0
  %1860 = vmatprep.subr.mxu0 0.0
  %1861 = vmatpush1.msra.mxu0 0.0
  %1862 = vmatprep.subr.mxu0 0.0
  %1863 = vmatpush1.msra.mxu0 0.0
  %1864 = vmatprep.subr.mxu0 0.0
  %1865 = vmatpush1.msra.mxu0 0.0
  %1866 = vmatprep.subr.mxu0 0.0
  %1867 = vmatpush1.msra.mxu0 0.0
  %1868 = vmatprep.subr.mxu0 0.0
  %1869 = vmatpush1.msra.mxu0 %v26
  %1870 = vmatprep.subr.mxu0 0.0
  %1871 = vmatpush1.msra.mxu0 %v25
  %1872 = vmatprep.subr.mxu0 0.0
  %1873 = vmatpush1.msra.mxu0 %v24
  %1874 = vmatprep.subr.mxu0 0.0
  %1875 = vmatpush1.msra.mxu0 %v23
  %1876 = vmatprep.subr.mxu0 0.0
  %1877 = vmatpush2.msra.mxu0 0.0
  %1878 = vmatprep.subr.mxu0 0.0
  %1879 = vmatpush2.msra.mxu0 0.0
  %1880 = vmatprep.subr.mxu0 0.0
  %1881 = vmatpush2.msra.mxu0 0.0
  %1882 = vmatprep.subr.mxu0 0.0
  %1883 = vmatpush2.msra.mxu0 0.0
  %1884 = vmatprep.subr.mxu0 0.0
  %1885 = vmatpush2.msra.mxu0 0.0
  %1886 = vmatprep.subr.mxu0 0.0
  %1887 = vmatpush2.msra.mxu0 0.0
  %1888 = vmatprep.subr.mxu0 0.0
  %1889 = vmatpush2.msra.mxu0 0.0
  %1890 = vmatprep.subr.mxu0 0.0
  %1891 = vmatpush2.msra.mxu0 0.0
  %1892 = vmatprep.subr.mxu0 0.0
  %1893 = vmatpush2.msra.mxu0 0.0
  %1894 = vmatprep.subr.mxu0 0.0
  %1895 = vmatpush2.msra.mxu0 0.0
  %1896 = vmatprep.subr.mxu0 0.0
  %1897 = vmatpush2.msra.mxu0 0.0
  %1898 = vmatprep.subr.mxu0 0.0
  %1899 = vmatpush2.msra.mxu0 0.0
  %1900 = vmatprep.subr.mxu0 0.0
  %1901 = vmatpush2.msra.mxu0 0.0
  %1902 = vmatprep.subr.mxu0 0.0
  %1903 = vmatpush2.msra.mxu0 0.0
  %1904 = vmatprep.subr.mxu0 0.0
  %1905 = vmatpush2.msra.mxu0 0.0
  %1906 = vmatprep.subr.mxu0 0.0
  %1907 = vmatpush2.msra.mxu0 0.0
  %1908 = vmatprep.mubr.f32.mxu0 0.0
  %1909 = vmatmul.mubr.f32.gmra.mxu0 %v1842
  %v1910 = vpop.f32.mrf.mxu0
  %v1911 = vadd.f32 0.0, %v1910
  %v1912 = vpop.f32.mrf.mxu0
  %1913 = vdwg.mxu0
  %v1915 = vrot.slane %v1911, 3
  %v1916 = vrot.slane %v1911, 4
  %v1917 = vrot.slane %v1911, 5
  %v1918 = vrot.slane %v1911, 6
  %v1919 = vrot.slane %v1911, 7
  %v1920 = vrot.slane %v1911, 1
  %v1921 = vrot.slane %v1911, 2
  %v1930 = vadd.f32 %v139, %v1915
  %v1931 = vadd.f32 %v144, %v1916
  %v1932 = vadd.f32 %v149, %v1917
  %v1933 = vadd.f32 %v154, %v1918
  %v1934 = vadd.f32 %v159, %v1919
  %v1935 = vadd.f32 %v164, %v1911
  %v1936 = vadd.f32 %v169, %v1920
  %v1937 = vadd.f32 %v174, %v1921
  %v1938 = vxor.u32 %v1930, 2147483648
  %v1939 = vxor.u32 %v1931, 2147483648
  %v1940 = vxor.u32 %v1932, 2147483648
  %v1941 = vxor.u32 %v1933, 2147483648
  %v1942 = vxor.u32 %v1934, 2147483648
  %v1943 = vxor.u32 %v1935, 2147483648
  %v1944 = vxor.u32 %v1936, 2147483648
  %v1945 = vxor.u32 %v1937, 2147483648
  %v1946 = vmul.f32 %v1938, 1.442695
  %v1947 = vpow.pop %v1946
  %v1948 = vmul.f32 %v1939, 1.442695
  %v1949 = vpow.pop %v1948
  %v1950 = vmul.f32 %v1940, 1.442695
  %v1951 = vpow.pop %v1950
  %v1952 = vmul.f32 %v1941, 1.442695
  %v1953 = vpow.pop %v1952
  %v1954 = vmul.f32 %v1942, 1.442695
  %v1955 = vpow.pop %v1954
  %v1956 = vmul.f32 %v1943, 1.442695
  %v1957 = vpow.pop %v1956
  %v1958 = vmul.f32 %v1944, 1.442695
  %v1959 = vpow.pop %v1958
  %v1960 = vmul.f32 %v1945, 1.442695
  %v1961 = vpow.pop %v1960
  %v1962 = vadd.f32 %v1947, 1.0
  %v1963 = vadd.f32 %v1949, 1.0
  %v1964 = vadd.f32 %v1951, 1.0
  %v1965 = vadd.f32 %v1953, 1.0
  %v1966 = vadd.f32 %v1955, 1.0
  %v1967 = vadd.f32 %v1957, 1.0
  %v1968 = vadd.f32 %v1959, 1.0
  %v1969 = vadd.f32 %v1961, 1.0
  %v1970 = vrcp.pop %v1962
  %v1971 = vmul.f32 1.0, %v1970
  %v1972 = vrcp.pop %v1963
  %v1973 = vmul.f32 1.0, %v1972
  %v1974 = vrcp.pop %v1964
  %v1975 = vmul.f32 1.0, %v1974
  %v1976 = vrcp.pop %v1965
  %v1977 = vmul.f32 1.0, %v1976
  %v1978 = vrcp.pop %v1966
  %v1979 = vmul.f32 1.0, %v1978
  %v1980 = vrcp.pop %v1967
  %v1981 = vmul.f32 1.0, %v1980
  %v1982 = vrcp.pop %v1968
  %v1983 = vmul.f32 1.0, %v1982
  %v1984 = vrcp.pop %v1969
  %v1985 = vmul.f32 1.0, %v1984
  %v1986 = vtanh.pop %v1930
  %v1987 = vtanh.pop %v1931
  %v1988 = vtanh.pop %v1932
  %v1989 = vtanh.pop %v1933
  %v1990 = vtanh.pop %v1934
  %v1991 = vtanh.pop %v1935
  %v1992 = vtanh.pop %v1936
  %v1993 = vtanh.pop %v1937
  %v2002 = vrot.slane %v1762, 7
  %v2003 = vrot.slane %v1763, 7
  %v2004 = vrot.slane %v1764, 7
  %v2005 = vrot.slane %v1765, 7
  %v2006 = vrot.slane %v1766, 7
  %v2007 = vrot.slane %v1767, 7
  %v2008 = vrot.slane %v1768, 7
  %v2009 = vrot.slane %v1769, 7
  %v2018 = vmul.f32 %v1971, %v2002
  %v2019 = vmul.f32 %v1973, %v2003
  %v2020 = vmul.f32 %v1975, %v2004
  %v2021 = vmul.f32 %v1977, %v2005
  %v2022 = vmul.f32 %v1979, %v2006
  %v2023 = vmul.f32 %v1981, %v2007
  %v2024 = vmul.f32 %v1983, %v2008
  %v2025 = vmul.f32 %v1985, %v2009
  %2034 = vrot.lane.b32.xlu0 %v1986, 32
  %v2035 = vpop.permute.xlu0 %2034
  %2036 = vrot.lane.b32.xlu0 %v1987, 32
  %v2037 = vpop.permute.xlu0 %2036
  %2038 = vrot.lane.b32.xlu0 %v1988, 32
  %v2039 = vpop.permute.xlu0 %2038
  %2040 = vrot.lane.b32.xlu0 %v1989, 32
  %v2041 = vpop.permute.xlu0 %2040
  %2042 = vrot.lane.b32.xlu0 %v1990, 32
  %v2043 = vpop.permute.xlu0 %2042
  %2044 = vrot.lane.b32.xlu0 %v1991, 32
  %v2045 = vpop.permute.xlu0 %2044
  %2046 = vrot.lane.b32.xlu0 %v1992, 32
  %v2047 = vpop.permute.xlu0 %2046
  %2048 = vrot.lane.b32.xlu0 %v1993, 32
  %v2049 = vpop.permute.xlu0 %2048
  %v2058 = vmul.f32 %v1971, %v2035
  %v2059 = vmul.f32 %v1973, %v2037
  %v2060 = vmul.f32 %v1975, %v2039
  %v2061 = vmul.f32 %v1977, %v2041
  %v2062 = vmul.f32 %v1979, %v2043
  %v2063 = vmul.f32 %v1981, %v2045
  %v2064 = vmul.f32 %v1983, %v2047
  %v2065 = vmul.f32 %v1985, %v2049
  %2074 = vrot.lane.b32.xlu0 %v2058, 32
  %v2075 = vpop.permute.xlu0 %2074
  %2076 = vrot.lane.b32.xlu0 %v2059, 32
  %v2077 = vpop.permute.xlu0 %2076
  %2078 = vrot.lane.b32.xlu0 %v2060, 32
  %v2079 = vpop.permute.xlu0 %2078
  %2080 = vrot.lane.b32.xlu0 %v2061, 32
  %v2081 = vpop.permute.xlu0 %2080
  %2082 = vrot.lane.b32.xlu0 %v2062, 32
  %v2083 = vpop.permute.xlu0 %2082
  %2084 = vrot.lane.b32.xlu0 %v2063, 32
  %v2085 = vpop.permute.xlu0 %2084
  %2086 = vrot.lane.b32.xlu0 %v2064, 32
  %v2087 = vpop.permute.xlu0 %2086
  %2088 = vrot.lane.b32.xlu0 %v2065, 32
  %v2089 = vpop.permute.xlu0 %2088
  %v2098 = vadd.f32 %v2018, %v2075
  %v2099 = vadd.f32 %v2019, %v2077
  %v2100 = vadd.f32 %v2020, %v2079
  %v2101 = vadd.f32 %v2021, %v2081
  %v2102 = vadd.f32 %v2022, %v2083
  %v2103 = vadd.f32 %v2023, %v2085
  %v2104 = vadd.f32 %v2024, %v2087
  %v2105 = vadd.f32 %v2025, %v2089
  %v2106 = vtanh.pop %v2098
  %v2107 = vtanh.pop %v2099
  %v2108 = vtanh.pop %v2100
  %v2109 = vtanh.pop %v2101
  %v2110 = vtanh.pop %v2102
  %v2111 = vtanh.pop %v2103
  %v2112 = vtanh.pop %v2104
  %v2113 = vtanh.pop %v2105
  %2122 = vrot.lane.b32.xlu0 %v2106, 32
  %v2123 = vpop.permute.xlu0 %2122
  %2124 = vrot.lane.b32.xlu0 %v2107, 32
  %v2125 = vpop.permute.xlu0 %2124
  %2126 = vrot.lane.b32.xlu0 %v2108, 32
  %v2127 = vpop.permute.xlu0 %2126
  %2128 = vrot.lane.b32.xlu0 %v2109, 32
  %v2129 = vpop.permute.xlu0 %2128
  %2130 = vrot.lane.b32.xlu0 %v2110, 32
  %v2131 = vpop.permute.xlu0 %2130
  %2132 = vrot.lane.b32.xlu0 %v2111, 32
  %v2133 = vpop.permute.xlu0 %2132
  %2134 = vrot.lane.b32.xlu0 %v2112, 32
  %v2135 = vpop.permute.xlu0 %2134
  %2136 = vrot.lane.b32.xlu0 %v2113, 32
  %v2137 = vpop.permute.xlu0 %2136
  %v2146 = vmul.f32 %v1971, %v2123
  %v2147 = vmul.f32 %v1973, %v2125
  %v2148 = vmul.f32 %v1975, %v2127
  %v2149 = vmul.f32 %v1977, %v2129
  %v2150 = vmul.f32 %v1979, %v2131
  %v2151 = vmul.f32 %v1981, %v2133
  %v2152 = vmul.f32 %v1983, %v2135
  %v2153 = vmul.f32 %v1985, %v2137
  %v2162 = vrot.slane %v2146, 5
  %v2163 = vrot.slane %v2147, 4
  %v2164 = vsel %vm476, %v2163, %v2162
  %v2165 = vrot.slane %v2148, 3
  %v2166 = vsel %vm479, %v2165, %v2164
  %v2167 = vrot.slane %v2149, 2
  %v2168 = vsel %vm482, %v2167, %v2166
  %v2169 = vrot.slane %v2150, 1
  %v2170 = vsel %vm485, %v2169, %v2168
  %v2171 = vsel %vm488, %v2151, %v2170
  %v2172 = vrot.slane %v2152, 7
  %v2173 = vsel %vm491, %v2172, %v2171
  %v2174 = vrot.slane %v2153, 6
  %v2175 = vsel %vm494, %v2174, %v2173
  %2176 = vrot.lane.b32.xlu0 %v2175, 64
  %v2177 = vpop.permute.xlu0 %2176
  %v2178 = vsel %vm177, %v2177, 0
  %2180 = vmatprep.subr.mxu0 0.0
  %2181 = vmatpush1.msra.mxu0 0.0
  %2182 = vmatprep.subr.mxu0 0.0
  %2183 = vmatpush1.msra.mxu0 0.0
  %2184 = vmatprep.subr.mxu0 0.0
  %2185 = vmatpush1.msra.mxu0 0.0
  %2186 = vmatprep.subr.mxu0 0.0
  %2187 = vmatpush1.msra.mxu0 0.0
  %2188 = vmatprep.subr.mxu0 0.0
  %2189 = vmatpush1.msra.mxu0 0.0
  %2190 = vmatprep.subr.mxu0 0.0
  %2191 = vmatpush1.msra.mxu0 0.0
  %2192 = vmatprep.subr.mxu0 0.0
  %2193 = vmatpush1.msra.mxu0 0.0
  %2194 = vmatprep.subr.mxu0 0.0
  %2195 = vmatpush1.msra.mxu0 0.0
  %2196 = vmatprep.subr.mxu0 0.0
  %2197 = vmatpush1.msra.mxu0 0.0
  %2198 = vmatprep.subr.mxu0 0.0
  %2199 = vmatpush1.msra.mxu0 0.0
  %2200 = vmatprep.subr.mxu0 0.0
  %2201 = vmatpush1.msra.mxu0 0.0
  %2202 = vmatprep.subr.mxu0 0.0
  %2203 = vmatpush1.msra.mxu0 0.0
  %2204 = vmatprep.subr.mxu0 0.0
  %2205 = vmatpush1.msra.mxu0 %v26
  %2206 = vmatprep.subr.mxu0 0.0
  %2207 = vmatpush1.msra.mxu0 %v25
  %2208 = vmatprep.subr.mxu0 0.0
  %2209 = vmatpush1.msra.mxu0 %v24
  %2210 = vmatprep.subr.mxu0 0.0
  %2211 = vmatpush1.msra.mxu0 %v23
  %2212 = vmatprep.subr.mxu0 0.0
  %2213 = vmatpush2.msra.mxu0 0.0
  %2214 = vmatprep.subr.mxu0 0.0
  %2215 = vmatpush2.msra.mxu0 0.0
  %2216 = vmatprep.subr.mxu0 0.0
  %2217 = vmatpush2.msra.mxu0 0.0
  %2218 = vmatprep.subr.mxu0 0.0
  %2219 = vmatpush2.msra.mxu0 0.0
  %2220 = vmatprep.subr.mxu0 0.0
  %2221 = vmatpush2.msra.mxu0 0.0
  %2222 = vmatprep.subr.mxu0 0.0
  %2223 = vmatpush2.msra.mxu0 0.0
  %2224 = vmatprep.subr.mxu0 0.0
  %2225 = vmatpush2.msra.mxu0 0.0
  %2226 = vmatprep.subr.mxu0 0.0
  %2227 = vmatpush2.msra.mxu0 0.0
  %2228 = vmatprep.subr.mxu0 0.0
  %2229 = vmatpush2.msra.mxu0 0.0
  %2230 = vmatprep.subr.mxu0 0.0
  %2231 = vmatpush2.msra.mxu0 0.0
  %2232 = vmatprep.subr.mxu0 0.0
  %2233 = vmatpush2.msra.mxu0 0.0
  %2234 = vmatprep.subr.mxu0 0.0
  %2235 = vmatpush2.msra.mxu0 0.0
  %2236 = vmatprep.subr.mxu0 0.0
  %2237 = vmatpush2.msra.mxu0 0.0
  %2238 = vmatprep.subr.mxu0 0.0
  %2239 = vmatpush2.msra.mxu0 0.0
  %2240 = vmatprep.subr.mxu0 0.0
  %2241 = vmatpush2.msra.mxu0 0.0
  %2242 = vmatprep.subr.mxu0 0.0
  %2243 = vmatpush2.msra.mxu0 0.0
  %2244 = vmatprep.mubr.f32.mxu0 0.0
  %2245 = vmatmul.mubr.f32.gmra.mxu0 %v2178
  %v2246 = vpop.f32.mrf.mxu0
  %v2247 = vadd.f32 0.0, %v2246
  %v2248 = vpop.f32.mrf.mxu0
  %2249 = vdwg.mxu0
  %v2251 = vrot.slane %v2247, 2
  %v2252 = vrot.slane %v2247, 3
  %v2253 = vrot.slane %v2247, 4
  %v2254 = vrot.slane %v2247, 5
  %v2255 = vrot.slane %v2247, 6
  %v2256 = vrot.slane %v2247, 7
  %v2257 = vrot.slane %v2247, 1
  %v2266 = vadd.f32 %v139, %v2251
  %v2267 = vadd.f32 %v144, %v2252
  %v2268 = vadd.f32 %v149, %v2253
  %v2269 = vadd.f32 %v154, %v2254
  %v2270 = vadd.f32 %v159, %v2255
  %v2271 = vadd.f32 %v164, %v2256
  %v2272 = vadd.f32 %v169, %v2247
  %v2273 = vadd.f32 %v174, %v2257
  %v2274 = vxor.u32 %v2266, 2147483648
  %v2275 = vxor.u32 %v2267, 2147483648
  %v2276 = vxor.u32 %v2268, 2147483648
  %v2277 = vxor.u32 %v2269, 2147483648
  %v2278 = vxor.u32 %v2270, 2147483648
  %v2279 = vxor.u32 %v2271, 2147483648
  %v2280 = vxor.u32 %v2272, 2147483648
  %v2281 = vxor.u32 %v2273, 2147483648
  %v2282 = vmul.f32 %v2274, 1.442695
  %v2283 = vpow.pop %v2282
  %v2284 = vmul.f32 %v2275, 1.442695
  %v2285 = vpow.pop %v2284
  %v2286 = vmul.f32 %v2276, 1.442695
  %v2287 = vpow.pop %v2286
  %v2288 = vmul.f32 %v2277, 1.442695
  %v2289 = vpow.pop %v2288
  %v2290 = vmul.f32 %v2278, 1.442695
  %v2291 = vpow.pop %v2290
  %v2292 = vmul.f32 %v2279, 1.442695
  %v2293 = vpow.pop %v2292
  %v2294 = vmul.f32 %v2280, 1.442695
  %v2295 = vpow.pop %v2294
  %v2296 = vmul.f32 %v2281, 1.442695
  %v2297 = vpow.pop %v2296
  %v2298 = vadd.f32 %v2283, 1.0
  %v2299 = vadd.f32 %v2285, 1.0
  %v2300 = vadd.f32 %v2287, 1.0
  %v2301 = vadd.f32 %v2289, 1.0
  %v2302 = vadd.f32 %v2291, 1.0
  %v2303 = vadd.f32 %v2293, 1.0
  %v2304 = vadd.f32 %v2295, 1.0
  %v2305 = vadd.f32 %v2297, 1.0
  %v2306 = vrcp.pop %v2298
  %v2307 = vmul.f32 1.0, %v2306
  %v2308 = vrcp.pop %v2299
  %v2309 = vmul.f32 1.0, %v2308
  %v2310 = vrcp.pop %v2300
  %v2311 = vmul.f32 1.0, %v2310
  %v2312 = vrcp.pop %v2301
  %v2313 = vmul.f32 1.0, %v2312
  %v2314 = vrcp.pop %v2302
  %v2315 = vmul.f32 1.0, %v2314
  %v2316 = vrcp.pop %v2303
  %v2317 = vmul.f32 1.0, %v2316
  %v2318 = vrcp.pop %v2304
  %v2319 = vmul.f32 1.0, %v2318
  %v2320 = vrcp.pop %v2305
  %v2321 = vmul.f32 1.0, %v2320
  %v2322 = vtanh.pop %v2266
  %v2323 = vtanh.pop %v2267
  %v2324 = vtanh.pop %v2268
  %v2325 = vtanh.pop %v2269
  %v2326 = vtanh.pop %v2270
  %v2327 = vtanh.pop %v2271
  %v2328 = vtanh.pop %v2272
  %v2329 = vtanh.pop %v2273
  %v2338 = vrot.slane %v2098, 7
  %v2339 = vrot.slane %v2099, 7
  %v2340 = vrot.slane %v2100, 7
  %v2341 = vrot.slane %v2101, 7
  %v2342 = vrot.slane %v2102, 7
  %v2343 = vrot.slane %v2103, 7
  %v2344 = vrot.slane %v2104, 7
  %v2345 = vrot.slane %v2105, 7
  %v2354 = vmul.f32 %v2307, %v2338
  %v2355 = vmul.f32 %v2309, %v2339
  %v2356 = vmul.f32 %v2311, %v2340
  %v2357 = vmul.f32 %v2313, %v2341
  %v2358 = vmul.f32 %v2315, %v2342
  %v2359 = vmul.f32 %v2317, %v2343
  %v2360 = vmul.f32 %v2319, %v2344
  %v2361 = vmul.f32 %v2321, %v2345
  %2370 = vrot.lane.b32.xlu0 %v2322, 32
  %v2371 = vpop.permute.xlu0 %2370
  %2372 = vrot.lane.b32.xlu0 %v2323, 32
  %v2373 = vpop.permute.xlu0 %2372
  %2374 = vrot.lane.b32.xlu0 %v2324, 32
  %v2375 = vpop.permute.xlu0 %2374
  %2376 = vrot.lane.b32.xlu0 %v2325, 32
  %v2377 = vpop.permute.xlu0 %2376
  %2378 = vrot.lane.b32.xlu0 %v2326, 32
  %v2379 = vpop.permute.xlu0 %2378
  %2380 = vrot.lane.b32.xlu0 %v2327, 32
  %v2381 = vpop.permute.xlu0 %2380
  %2382 = vrot.lane.b32.xlu0 %v2328, 32
  %v2383 = vpop.permute.xlu0 %2382
  %2384 = vrot.lane.b32.xlu0 %v2329, 32
  %v2385 = vpop.permute.xlu0 %2384
  %v2394 = vmul.f32 %v2307, %v2371
  %v2395 = vmul.f32 %v2309, %v2373
  %v2396 = vmul.f32 %v2311, %v2375
  %v2397 = vmul.f32 %v2313, %v2377
  %v2398 = vmul.f32 %v2315, %v2379
  %v2399 = vmul.f32 %v2317, %v2381
  %v2400 = vmul.f32 %v2319, %v2383
  %v2401 = vmul.f32 %v2321, %v2385
  %2410 = vrot.lane.b32.xlu0 %v2394, 32
  %v2411 = vpop.permute.xlu0 %2410
  %2412 = vrot.lane.b32.xlu0 %v2395, 32
  %v2413 = vpop.permute.xlu0 %2412
  %2414 = vrot.lane.b32.xlu0 %v2396, 32
  %v2415 = vpop.permute.xlu0 %2414
  %2416 = vrot.lane.b32.xlu0 %v2397, 32
  %v2417 = vpop.permute.xlu0 %2416
  %2418 = vrot.lane.b32.xlu0 %v2398, 32
  %v2419 = vpop.permute.xlu0 %2418
  %2420 = vrot.lane.b32.xlu0 %v2399, 32
  %v2421 = vpop.permute.xlu0 %2420
  %2422 = vrot.lane.b32.xlu0 %v2400, 32
  %v2423 = vpop.permute.xlu0 %2422
  %2424 = vrot.lane.b32.xlu0 %v2401, 32
  %v2425 = vpop.permute.xlu0 %2424
  %v2434 = vadd.f32 %v2354, %v2411
  %v2435 = vadd.f32 %v2355, %v2413
  %v2436 = vadd.f32 %v2356, %v2415
  %v2437 = vadd.f32 %v2357, %v2417
  %v2438 = vadd.f32 %v2358, %v2419
  %v2439 = vadd.f32 %v2359, %v2421
  %v2440 = vadd.f32 %v2360, %v2423
  %v2441 = vadd.f32 %v2361, %v2425
  %v2442 = vtanh.pop %v2434
  %v2443 = vtanh.pop %v2435
  %v2444 = vtanh.pop %v2436
  %v2445 = vtanh.pop %v2437
  %v2446 = vtanh.pop %v2438
  %v2447 = vtanh.pop %v2439
  %v2448 = vtanh.pop %v2440
  %v2449 = vtanh.pop %v2441
  %2458 = vrot.lane.b32.xlu0 %v2442, 32
  %v2459 = vpop.permute.xlu0 %2458
  %2460 = vrot.lane.b32.xlu0 %v2443, 32
  %v2461 = vpop.permute.xlu0 %2460
  %2462 = vrot.lane.b32.xlu0 %v2444, 32
  %v2463 = vpop.permute.xlu0 %2462
  %2464 = vrot.lane.b32.xlu0 %v2445, 32
  %v2465 = vpop.permute.xlu0 %2464
  %2466 = vrot.lane.b32.xlu0 %v2446, 32
  %v2467 = vpop.permute.xlu0 %2466
  %2468 = vrot.lane.b32.xlu0 %v2447, 32
  %v2469 = vpop.permute.xlu0 %2468
  %2470 = vrot.lane.b32.xlu0 %v2448, 32
  %v2471 = vpop.permute.xlu0 %2470
  %2472 = vrot.lane.b32.xlu0 %v2449, 32
  %v2473 = vpop.permute.xlu0 %2472
  %v2482 = vmul.f32 %v2307, %v2459
  %v2483 = vmul.f32 %v2309, %v2461
  %v2484 = vmul.f32 %v2311, %v2463
  %v2485 = vmul.f32 %v2313, %v2465
  %v2486 = vmul.f32 %v2315, %v2467
  %v2487 = vmul.f32 %v2317, %v2469
  %v2488 = vmul.f32 %v2319, %v2471
  %v2489 = vmul.f32 %v2321, %v2473
  %v2498 = vrot.slane %v2482, 6
  %v2499 = vrot.slane %v2483, 5
  %v2500 = vsel %vm476, %v2499, %v2498
  %v2501 = vrot.slane %v2484, 4
  %v2502 = vsel %vm479, %v2501, %v2500
  %v2503 = vrot.slane %v2485, 3
  %v2504 = vsel %vm482, %v2503, %v2502
  %v2505 = vrot.slane %v2486, 2
  %v2506 = vsel %vm485, %v2505, %v2504
  %v2507 = vrot.slane %v2487, 1
  %v2508 = vsel %vm488, %v2507, %v2506
  %v2509 = vsel %vm491, %v2488, %v2508
  %v2510 = vrot.slane %v2489, 7
  %v2511 = vsel %vm494, %v2510, %v2509
  %2512 = vrot.lane.b32.xlu0 %v2511, 64
  %v2513 = vpop.permute.xlu0 %2512
  %v2514 = vsel %vm177, %v2513, 0
  %2516 = vmatprep.subr.mxu0 0.0
  %2517 = vmatpush1.msra.mxu0 0.0
  %2518 = vmatprep.subr.mxu0 0.0
  %2519 = vmatpush1.msra.mxu0 0.0
  %2520 = vmatprep.subr.mxu0 0.0
  %2521 = vmatpush1.msra.mxu0 0.0
  %2522 = vmatprep.subr.mxu0 0.0
  %2523 = vmatpush1.msra.mxu0 0.0
  %2524 = vmatprep.subr.mxu0 0.0
  %2525 = vmatpush1.msra.mxu0 0.0
  %2526 = vmatprep.subr.mxu0 0.0
  %2527 = vmatpush1.msra.mxu0 0.0
  %2528 = vmatprep.subr.mxu0 0.0
  %2529 = vmatpush1.msra.mxu0 0.0
  %2530 = vmatprep.subr.mxu0 0.0
  %2531 = vmatpush1.msra.mxu0 0.0
  %2532 = vmatprep.subr.mxu0 0.0
  %2533 = vmatpush1.msra.mxu0 0.0
  %2534 = vmatprep.subr.mxu0 0.0
  %2535 = vmatpush1.msra.mxu0 0.0
  %2536 = vmatprep.subr.mxu0 0.0
  %2537 = vmatpush1.msra.mxu0 0.0
  %2538 = vmatprep.subr.mxu0 0.0
  %2539 = vmatpush1.msra.mxu0 0.0
  %2540 = vmatprep.subr.mxu0 0.0
  %2541 = vmatpush1.msra.mxu0 %v26
  %2542 = vmatprep.subr.mxu0 0.0
  %2543 = vmatpush1.msra.mxu0 %v25
  %2544 = vmatprep.subr.mxu0 0.0
  %2545 = vmatpush1.msra.mxu0 %v24
  %2546 = vmatprep.subr.mxu0 0.0
  %2547 = vmatpush1.msra.mxu0 %v23
  %2548 = vmatprep.subr.mxu0 0.0
  %2549 = vmatpush2.msra.mxu0 0.0
  %2550 = vmatprep.subr.mxu0 0.0
  %2551 = vmatpush2.msra.mxu0 0.0
  %2552 = vmatprep.subr.mxu0 0.0
  %2553 = vmatpush2.msra.mxu0 0.0
  %2554 = vmatprep.subr.mxu0 0.0
  %2555 = vmatpush2.msra.mxu0 0.0
  %2556 = vmatprep.subr.mxu0 0.0
  %2557 = vmatpush2.msra.mxu0 0.0
  %2558 = vmatprep.subr.mxu0 0.0
  %2559 = vmatpush2.msra.mxu0 0.0
  %2560 = vmatprep.subr.mxu0 0.0
  %2561 = vmatpush2.msra.mxu0 0.0
  %2562 = vmatprep.subr.mxu0 0.0
  %2563 = vmatpush2.msra.mxu0 0.0
  %2564 = vmatprep.subr.mxu0 0.0
  %2565 = vmatpush2.msra.mxu0 0.0
  %2566 = vmatprep.subr.mxu0 0.0
  %2567 = vmatpush2.msra.mxu0 0.0
  %2568 = vmatprep.subr.mxu0 0.0
  %2569 = vmatpush2.msra.mxu0 0.0
  %2570 = vmatprep.subr.mxu0 0.0
  %2571 = vmatpush2.msra.mxu0 0.0
  %2572 = vmatprep.subr.mxu0 0.0
  %2573 = vmatpush2.msra.mxu0 0.0
  %2574 = vmatprep.subr.mxu0 0.0
  %2575 = vmatpush2.msra.mxu0 0.0
  %2576 = vmatprep.subr.mxu0 0.0
  %2577 = vmatpush2.msra.mxu0 0.0
  %2578 = vmatprep.subr.mxu0 0.0
  %2579 = vmatpush2.msra.mxu0 0.0
  %2580 = vmatprep.mubr.f32.mxu0 0.0
  %2581 = vmatmul.mubr.f32.gmra.mxu0 %v2514
  %v2582 = vpop.f32.mrf.mxu0
  %v2583 = vadd.f32 0.0, %v2582
  %v2584 = vpop.f32.mrf.mxu0
  %2585 = vdwg.mxu0
  %v2587 = vrot.slane %v2583, 1
  %v2588 = vrot.slane %v2583, 2
  %v2589 = vrot.slane %v2583, 3
  %v2590 = vrot.slane %v2583, 4
  %v2591 = vrot.slane %v2583, 5
  %v2592 = vrot.slane %v2583, 6
  %v2593 = vrot.slane %v2583, 7
  %v2602 = vadd.f32 %v139, %v2587
  %v2603 = vadd.f32 %v144, %v2588
  %v2604 = vadd.f32 %v149, %v2589
  %v2605 = vadd.f32 %v154, %v2590
  %v2606 = vadd.f32 %v159, %v2591
  %v2607 = vadd.f32 %v164, %v2592
  %v2608 = vadd.f32 %v169, %v2593
  %v2609 = vadd.f32 %v174, %v2583
  %v2610 = vxor.u32 %v2602, 2147483648
  %v2611 = vxor.u32 %v2603, 2147483648
  %v2612 = vxor.u32 %v2604, 2147483648
  %v2613 = vxor.u32 %v2605, 2147483648
  %v2614 = vxor.u32 %v2606, 2147483648
  %v2615 = vxor.u32 %v2607, 2147483648
  %v2616 = vxor.u32 %v2608, 2147483648
  %v2617 = vxor.u32 %v2609, 2147483648
  %v2618 = vmul.f32 %v2610, 1.442695
  %v2619 = vpow.pop %v2618
  %v2620 = vmul.f32 %v2611, 1.442695
  %v2621 = vpow.pop %v2620
  %v2622 = vmul.f32 %v2612, 1.442695
  %v2623 = vpow.pop %v2622
  %v2624 = vmul.f32 %v2613, 1.442695
  %v2625 = vpow.pop %v2624
  %v2626 = vmul.f32 %v2614, 1.442695
  %v2627 = vpow.pop %v2626
  %v2628 = vmul.f32 %v2615, 1.442695
  %v2629 = vpow.pop %v2628
  %v2630 = vmul.f32 %v2616, 1.442695
  %v2631 = vpow.pop %v2630
  %v2632 = vmul.f32 %v2617, 1.442695
  %v2633 = vpow.pop %v2632
  %v2634 = vadd.f32 %v2619, 1.0
  %v2635 = vadd.f32 %v2621, 1.0
  %v2636 = vadd.f32 %v2623, 1.0
  %v2637 = vadd.f32 %v2625, 1.0
  %v2638 = vadd.f32 %v2627, 1.0
  %v2639 = vadd.f32 %v2629, 1.0
  %v2640 = vadd.f32 %v2631, 1.0
  %v2641 = vadd.f32 %v2633, 1.0
  %v2642 = vrcp.pop %v2634
  %v2643 = vmul.f32 1.0, %v2642
  %v2644 = vrcp.pop %v2635
  %v2645 = vmul.f32 1.0, %v2644
  %v2646 = vrcp.pop %v2636
  %v2647 = vmul.f32 1.0, %v2646
  %v2648 = vrcp.pop %v2637
  %v2649 = vmul.f32 1.0, %v2648
  %v2650 = vrcp.pop %v2638
  %v2651 = vmul.f32 1.0, %v2650
  %v2652 = vrcp.pop %v2639
  %v2653 = vmul.f32 1.0, %v2652
  %v2654 = vrcp.pop %v2640
  %v2655 = vmul.f32 1.0, %v2654
  %v2656 = vrcp.pop %v2641
  %v2657 = vmul.f32 1.0, %v2656
  %v2658 = vtanh.pop %v2602
  %v2659 = vtanh.pop %v2603
  %v2660 = vtanh.pop %v2604
  %v2661 = vtanh.pop %v2605
  %v2662 = vtanh.pop %v2606
  %v2663 = vtanh.pop %v2607
  %v2664 = vtanh.pop %v2608
  %v2665 = vtanh.pop %v2609
  %v2674 = vrot.slane %v2434, 7
  %v2675 = vrot.slane %v2435, 7
  %v2676 = vrot.slane %v2436, 7
  %v2677 = vrot.slane %v2437, 7
  %v2678 = vrot.slane %v2438, 7
  %v2679 = vrot.slane %v2439, 7
  %v2680 = vrot.slane %v2440, 7
  %v2681 = vrot.slane %v2441, 7
  %v2690 = vmul.f32 %v2643, %v2674
  %v2691 = vmul.f32 %v2645, %v2675
  %v2692 = vmul.f32 %v2647, %v2676
  %v2693 = vmul.f32 %v2649, %v2677
  %v2694 = vmul.f32 %v2651, %v2678
  %v2695 = vmul.f32 %v2653, %v2679
  %v2696 = vmul.f32 %v2655, %v2680
  %v2697 = vmul.f32 %v2657, %v2681
  %2706 = vrot.lane.b32.xlu0 %v2658, 32
  %v2707 = vpop.permute.xlu0 %2706
  %2708 = vrot.lane.b32.xlu0 %v2659, 32
  %v2709 = vpop.permute.xlu0 %2708
  %2710 = vrot.lane.b32.xlu0 %v2660, 32
  %v2711 = vpop.permute.xlu0 %2710
  %2712 = vrot.lane.b32.xlu0 %v2661, 32
  %v2713 = vpop.permute.xlu0 %2712
  %2714 = vrot.lane.b32.xlu0 %v2662, 32
  %v2715 = vpop.permute.xlu0 %2714
  %2716 = vrot.lane.b32.xlu0 %v2663, 32
  %v2717 = vpop.permute.xlu0 %2716
  %2718 = vrot.lane.b32.xlu0 %v2664, 32
  %v2719 = vpop.permute.xlu0 %2718
  %2720 = vrot.lane.b32.xlu0 %v2665, 32
  %v2721 = vpop.permute.xlu0 %2720
  %v2730 = vmul.f32 %v2643, %v2707
  %v2731 = vmul.f32 %v2645, %v2709
  %v2732 = vmul.f32 %v2647, %v2711
  %v2733 = vmul.f32 %v2649, %v2713
  %v2734 = vmul.f32 %v2651, %v2715
  %v2735 = vmul.f32 %v2653, %v2717
  %v2736 = vmul.f32 %v2655, %v2719
  %v2737 = vmul.f32 %v2657, %v2721
  %2746 = vrot.lane.b32.xlu0 %v2730, 32
  %v2747 = vpop.permute.xlu0 %2746
  %2748 = vrot.lane.b32.xlu0 %v2731, 32
  %v2749 = vpop.permute.xlu0 %2748
  %2750 = vrot.lane.b32.xlu0 %v2732, 32
  %v2751 = vpop.permute.xlu0 %2750
  %2752 = vrot.lane.b32.xlu0 %v2733, 32
  %v2753 = vpop.permute.xlu0 %2752
  %2754 = vrot.lane.b32.xlu0 %v2734, 32
  %v2755 = vpop.permute.xlu0 %2754
  %2756 = vrot.lane.b32.xlu0 %v2735, 32
  %v2757 = vpop.permute.xlu0 %2756
  %2758 = vrot.lane.b32.xlu0 %v2736, 32
  %v2759 = vpop.permute.xlu0 %2758
  %2760 = vrot.lane.b32.xlu0 %v2737, 32
  %v2761 = vpop.permute.xlu0 %2760
  %v2770 = vadd.f32 %v2690, %v2747
  %v2771 = vadd.f32 %v2691, %v2749
  %v2772 = vadd.f32 %v2692, %v2751
  %v2773 = vadd.f32 %v2693, %v2753
  %v2774 = vadd.f32 %v2694, %v2755
  %v2775 = vadd.f32 %v2695, %v2757
  %v2776 = vadd.f32 %v2696, %v2759
  %v2777 = vadd.f32 %v2697, %v2761
  %v2778 = vtanh.pop %v2770
  %v2779 = vtanh.pop %v2771
  %v2780 = vtanh.pop %v2772
  %v2781 = vtanh.pop %v2773
  %v2782 = vtanh.pop %v2774
  %v2783 = vtanh.pop %v2775
  %v2784 = vtanh.pop %v2776
  %v2785 = vtanh.pop %v2777
  %2794 = vrot.lane.b32.xlu0 %v2778, 32
  %v2795 = vpop.permute.xlu0 %2794
  %2796 = vrot.lane.b32.xlu0 %v2779, 32
  %v2797 = vpop.permute.xlu0 %2796
  %2798 = vrot.lane.b32.xlu0 %v2780, 32
  %v2799 = vpop.permute.xlu0 %2798
  %2800 = vrot.lane.b32.xlu0 %v2781, 32
  %v2801 = vpop.permute.xlu0 %2800
  %2802 = vrot.lane.b32.xlu0 %v2782, 32
  %v2803 = vpop.permute.xlu0 %2802
  %2804 = vrot.lane.b32.xlu0 %v2783, 32
  %v2805 = vpop.permute.xlu0 %2804
  %2806 = vrot.lane.b32.xlu0 %v2784, 32
  %v2807 = vpop.permute.xlu0 %2806
  %2808 = vrot.lane.b32.xlu0 %v2785, 32
  %v2809 = vpop.permute.xlu0 %2808
  %v2818 = vmul.f32 %v2643, %v2795
  %v2819 = vmul.f32 %v2645, %v2797
  %v2820 = vmul.f32 %v2647, %v2799
  %v2821 = vmul.f32 %v2649, %v2801
  %v2822 = vmul.f32 %v2651, %v2803
  %v2823 = vmul.f32 %v2653, %v2805
  %v2824 = vmul.f32 %v2655, %v2807
  %v2825 = vmul.f32 %v2657, %v2809
  %v2826 = vld [vmem:[%s4] sm:$0xff]
  %v2827 = vld [vmem:[%s4 + $0x8] sm:$0xff]
  %v2828 = vld [vmem:[%s4 + $0x10] sm:$0xff]
  %v2829 = vld [vmem:[%s4 + $0x18] sm:$0xff]
  %v2830 = vld [vmem:[%s5] sm:$0x1]
  %v2832 = vlaneseq
  %v2833 = vshrl.u32 %v2832, 7
  %v2834 = vsub.s32 0, %v2833
  %v2835 = vrot.slane %v2830, %v2834
  %v2845 = vrot.slane %v2818, 7
  %v2846 = vrot.slane %v2819, 6
  %v2847 = vsel %vm476, %v2846, %v2845
  %v2848 = vrot.slane %v2820, 5
  %v2849 = vsel %vm479, %v2848, %v2847
  %v2850 = vrot.slane %v2821, 4
  %v2851 = vsel %vm482, %v2850, %v2849
  %v2852 = vrot.slane %v2822, 3
  %v2853 = vsel %vm485, %v2852, %v2851
  %v2854 = vrot.slane %v2823, 2
  %v2855 = vsel %vm488, %v2854, %v2853
  %v2856 = vrot.slane %v2824, 1
  %v2857 = vsel %vm491, %v2856, %v2855
  %v2858 = vsel %vm494, %v2825, %v2857
  %2859 = vrot.lane.b32.xlu0 %v2858, 64
  %v2860 = vpop.permute.xlu0 %2859
  %v2861 = vsel %vm177, %v2860, 0
  %2863 = vmatprep.subr.mxu0 0.0
  %2864 = vmatpush1.msra.mxu0 0.0
  %2865 = vmatprep.subr.mxu0 0.0
  %2866 = vmatpush1.msra.mxu0 0.0
  %2867 = vmatprep.subr.mxu0 0.0
  %2868 = vmatpush1.msra.mxu0 0.0
  %2869 = vmatprep.subr.mxu0 0.0
  %2870 = vmatpush1.msra.mxu0 0.0
  %2871 = vmatprep.subr.mxu0 0.0
  %2872 = vmatpush1.msra.mxu0 0.0
  %2873 = vmatprep.subr.mxu0 0.0
  %2874 = vmatpush1.msra.mxu0 0.0
  %2875 = vmatprep.subr.mxu0 0.0
  %2876 = vmatpush1.msra.mxu0 0.0
  %2877 = vmatprep.subr.mxu0 0.0
  %2878 = vmatpush1.msra.mxu0 0.0
  %2879 = vmatprep.subr.mxu0 0.0
  %2880 = vmatpush1.msra.mxu0 0.0
  %2881 = vmatprep.subr.mxu0 0.0
  %2882 = vmatpush1.msra.mxu0 0.0
  %2883 = vmatprep.subr.mxu0 0.0
  %2884 = vmatpush1.msra.mxu0 0.0
  %2885 = vmatprep.subr.mxu0 0.0
  %2886 = vmatpush1.msra.mxu0 0.0
  %2887 = vmatprep.subr.mxu0 0.0
  %2888 = vmatpush1.msra.mxu0 %v2829
  %2889 = vmatprep.subr.mxu0 0.0
  %2890 = vmatpush1.msra.mxu0 %v2828
  %2891 = vmatprep.subr.mxu0 0.0
  %2892 = vmatpush1.msra.mxu0 %v2827
  %2893 = vmatprep.subr.mxu0 0.0
  %2894 = vmatpush1.msra.mxu0 %v2826
  %2895 = vmatprep.subr.mxu0 0.0
  %2896 = vmatpush2.msra.mxu0 0.0
  %2897 = vmatprep.subr.mxu0 0.0
  %2898 = vmatpush2.msra.mxu0 0.0
  %2899 = vmatprep.subr.mxu0 0.0
  %2900 = vmatpush2.msra.mxu0 0.0
  %2901 = vmatprep.subr.mxu0 0.0
  %2902 = vmatpush2.msra.mxu0 0.0
  %2903 = vmatprep.subr.mxu0 0.0
  %2904 = vmatpush2.msra.mxu0 0.0
  %2905 = vmatprep.subr.mxu0 0.0
  %2906 = vmatpush2.msra.mxu0 0.0
  %2907 = vmatprep.subr.mxu0 0.0
  %2908 = vmatpush2.msra.mxu0 0.0
  %2909 = vmatprep.subr.mxu0 0.0
  %2910 = vmatpush2.msra.mxu0 0.0
  %2911 = vmatprep.subr.mxu0 0.0
  %2912 = vmatpush2.msra.mxu0 0.0
  %2913 = vmatprep.subr.mxu0 0.0
  %2914 = vmatpush2.msra.mxu0 0.0
  %2915 = vmatprep.subr.mxu0 0.0
  %2916 = vmatpush2.msra.mxu0 0.0
  %2917 = vmatprep.subr.mxu0 0.0
  %2918 = vmatpush2.msra.mxu0 0.0
  %2919 = vmatprep.subr.mxu0 0.0
  %2920 = vmatpush2.msra.mxu0 0.0
  %2921 = vmatprep.subr.mxu0 0.0
  %2922 = vmatpush2.msra.mxu0 0.0
  %2923 = vmatprep.subr.mxu0 0.0
  %2924 = vmatpush2.msra.mxu0 0.0
  %2925 = vmatprep.subr.mxu0 0.0
  %2926 = vmatpush2.msra.mxu0 0.0
  %2927 = vmatprep.mubr.f32.mxu0 0.0
  %2928 = vmatmul.mubr.f32.gmra.mxu0 %v2861
  %v2929 = vpop.f32.mrf.mxu0
  %v2930 = vadd.f32 %v2835, %v2929
  %v2931 = vpop.f32.mrf.mxu0
  %2932 = vdwg.mxu0
  %vm2933 = vcmask 15360
  %2934 = vst.msk [vmem:[%s6] sm:$0xff] %vm2933, %v2930
  // Predicated region
  $region26: #{tpu_custom_call.1} parent=0 // pred_check
    _
  $region27: #{tpu_custom_call.1} parent=0 // pred_check_branch
    %2936 = sbr.rel (0) target = $region29
  $region28: #{tpu_custom_call.1} parent=0 // pred_region
    _
  $region29: #{tpu_custom_call.1} parent=0 // pred_fallthru
    _
  // Predicated region
  $region30: #{tpu_custom_call.1} parent=0 // pred_check
    _
  $region31: #{tpu_custom_call.1} parent=0 // pred_check_branch
    %2938 = sbr.rel (0) target = $region33
  $region32: #{tpu_custom_call.1} parent=0 // pred_region
    _
  $region33: #{tpu_custom_call.1} parent=0 // pred_fallthru
    _

</llo_original>
